<compile_context>
chip_gen: v7x
topology: tpu7x:2x2x1
jax: 0.10.0
libtpu: 0.0.40
codegen_flags: <defaults>
</compile_context>

<pallas_src>
import functools

import jax
import jax.numpy as jnp
from jax.experimental import pallas as pl
from jax.experimental.pallas import tpu as pltpu


def _round_up(n, m):
    return ((n + m - 1) // m) * m


def _f32(v):
    return v if v.dtype == jnp.float32 else v.astype(jnp.float32)


def _vae_kernel(x_ref, eps_ref,
                w1_ref, b1_ref,        # img2hid
                wms_ref, bms_ref,      # fused hid2mu | hid2sigma (lane-padded cols)
                w4_ref, b4_ref,        # z2hid
                w5_ref, b5_ref,        # hid2img (lane-padded cols)
                xrec_ref, ms_ref,      # outputs: padded x_rec, padded [mu | sigma]
                *, z_dim):
    def linear(a, w_ref, b_ref):
        w = w_ref[...]
        # cast activations to the weight dtype so bf16 weights use the bf16 MXU path;
        # accumulation stays f32 via preferred_element_type.
        a = a if a.dtype == w.dtype else a.astype(w.dtype)
        return jnp.dot(a, w, preferred_element_type=jnp.float32) + _f32(b_ref[...])

    x = _f32(x_ref[...])

    # ---- encode ----
    h = jnp.maximum(linear(x, w1_ref, b1_ref), 0.0)                   # relu
    ms = linear(h, wms_ref, bms_ref)                                  # [bt, ms_dim_p]
    mu = ms[:, :z_dim]
    sigma = ms[:, z_dim:2 * z_dim]

    # ---- reparametrize: z = mu + eps * exp(sigma / 2)  (elementwise kept in f32) ----
    z = mu + _f32(eps_ref[...]) * jnp.exp(sigma * 0.5)

    # ---- decode (reference applies NO activation after z2hid) ----
    h2 = linear(z, w4_ref, b4_ref)
    logits = linear(h2, w5_ref, b5_ref)
    # sigmoid = 1 / (1 + exp(-x)): exp on EUP + approximate reciprocal (no VALU divide)
    x_rec = pl.reciprocal(1.0 + jnp.exp(-logits), approx=True)

    xrec_ref[...] = x_rec.astype(xrec_ref.dtype)
    ms_ref[...] = ms.astype(ms_ref.dtype)


def _pick_batch_tile(B, per_row_bytes, weight_bytes, vmem_budget_bytes):
    """Largest batch tile (multiple of 8, divides B) fitting the VMEM budget,
    preferring >= 2 grid steps so both v7x TensorCores get work."""
    assert B % 8 == 0, "batch size must be a multiple of 8"
    avail = max(vmem_budget_bytes - 2 * weight_bytes, 1 << 20)
    cap = int(max(8, min(1024, avail // per_row_bytes)))
    candidates = [t for t in range(8, min(B, cap) + 1, 8) if B % t == 0] or [8]
    two_step = [t for t in candidates if B // t >= 2]
    return max(two_step) if two_step else max(candidates)


def vae_forward(x, eps, params, *, batch_tile=None, vmem_budget_bytes=24 << 20):
    """Fused VAE forward. x: [B, input_dim], eps: [B, z_dim] ~ N(0, 1).
    Returns (x_rec, mu, sigma) in f32."""
    B, input_dim = x.shape
    z_dim = eps.shape[1]
    h_dim = params["w1"].shape[1]

    # ---- lane-dense output padding (last dims padded to multiples of 128) ----
    input_dim_p = _round_up(input_dim, 128)
    ms_dim = 2 * z_dim
    ms_dim_p = _round_up(ms_dim, 128)

    # fuse mu/sigma projections into one matmul; zero-pad output feature columns
    wms = jnp.concatenate([params["w2"], params["w3"]], axis=1)
    bms = jnp.concatenate([params["b2"], params["b3"]], axis=1)
    wms = jnp.pad(wms, ((0, 0), (0, ms_dim_p - ms_dim)))
    bms = jnp.pad(bms, ((0, 0), (0, ms_dim_p - ms_dim)))
    w5 = jnp.pad(params["w5"], ((0, 0), (0, input_dim_p - input_dim)))
    b5 = jnp.pad(params["b5"], ((0, 0), (0, input_dim_p - input_dim)))
    w1, b1 = params["w1"], params["b1"]
    w4, b4 = params["w4"], params["b4"]

    weights = (w1, b1, wms, bms, w4, b4, w5, b5)
    weight_bytes = sum(int(w.size) * w.dtype.itemsize for w in weights)

    # f32, double-buffered per-row tiles: x, eps (in) + padded x_rec, [mu|sigma] (out)
    per_row_bytes = 4 * 2 * (input_dim + z_dim + input_dim_p + ms_dim_p)
    if batch_tile is None:
        batch_tile = _pick_batch_tile(B, per_row_bytes, weight_bytes, vmem_budget_bytes)
    assert B % batch_tile == 0

    row = lambda i: (i, 0)      # activations: tile over the batch axis
    full = lambda i: (0, 0)     # weights/biases: same full block every step
    # TODO(synk): at realistic layer sizes, single-buffer the constant weight specs
    # (pipeline_mode=pl.Buffered(1)) to halve their VMEM footprint on v7x.

    in_specs = [
        pl.BlockSpec((batch_tile, input_dim), row),   # x
        pl.BlockSpec((batch_tile, z_dim), row),       # eps
        pl.BlockSpec((input_dim, h_dim), full),       # w1
        pl.BlockSpec((1, h_dim), full),               # b1
        pl.BlockSpec((h_dim, ms_dim_p), full),        # wms (fused mu|sigma)
        pl.BlockSpec((1, ms_dim_p), full),            # bms
        pl.BlockSpec((z_dim, h_dim), full),           # w4
        pl.BlockSpec((1, h_dim), full),               # b4
        pl.BlockSpec((h_dim, input_dim_p), full),     # w5
        pl.BlockSpec((1, input_dim_p), full),         # b5
    ]
    out_specs = [
        pl.BlockSpec((batch_tile, input_dim_p), row),  # padded x_rec
        pl.BlockSpec((batch_tile, ms_dim_p), row),     # padded [mu | sigma]
    ]
    out_shape = (jax.ShapeDtypeStruct((B, input_dim_p), jnp.float32),
                 jax.ShapeDtypeStruct((B, ms_dim_p), jnp.float32))

    # explicit scoped-VMEM limit with headroom, kept below v7x's 64 MiB physical VMEM
    vmem_est = 2 * weight_bytes + batch_tile * per_row_bytes
    vmem_limit = int(min(max(2 * vmem_est, 32 << 20), 60 << 20))

    grid_spec = pltpu.PrefetchScalarGridSpec(
        num_scalar_prefetch=0,
        grid=(B // batch_tile,),
        in_specs=in_specs,
        out_specs=out_specs,
    )

    xrec_p, ms_p = pl.pallas_call(
        functools.partial(_vae_kernel, z_dim=z_dim),
        out_shape=out_shape,
        grid_spec=grid_spec,
        compiler_params=pltpu.CompilerParams(
            dimension_semantics=("parallel",),
            vmem_limit_bytes=vmem_limit),
    )(x, eps, *weights)

    x_rec = xrec_p[:, :input_dim]
    mu = ms_p[:, :z_dim]
    sigma = ms_p[:, z_dim:ms_dim]
    return x_rec, mu, sigma


def init_params(key, input_dim, z_dim, h_dim, dtype=jnp.float32):
    """PyTorch-Linear-style uniform(-1/sqrt(fan_in), +1/sqrt(fan_in)) init.
    Weights stored transposed vs. PyTorch: [in_features, out_features]."""
    dims = {"1": (input_dim, h_dim), "2": (h_dim, z_dim), "3": (h_dim, z_dim),
            "4": (z_dim, h_dim), "5": (h_dim, input_dim)}
    params = {}
    keys = jax.random.split(key, 2 * len(dims))
    for idx, (tag, (din, dout)) in enumerate(dims.items()):
        bound = 1.0 / (din ** 0.5)
        w = jax.random.uniform(keys[2 * idx], (din, dout), jnp.float32, -bound, bound)
        b = jax.random.uniform(keys[2 * idx + 1], (1, dout), jnp.float32, -bound, bound)
        params["w" + tag] = w.astype(dtype)
        params["b" + tag] = b.astype(dtype)
    return params


def vae_forward_ref(x, eps, params):
    """Pure-JAX reference for correctness checking."""
    f32 = lambda v: v.astype(jnp.float32)
    h = jax.nn.relu(x @ f32(params["w1"]) + f32(params["b1"]))
    mu = h @ f32(params["w2"]) + f32(params["b2"])
    sigma = h @ f32(params["w3"]) + f32(params["b3"])
    z = mu + eps * jnp.exp(sigma / 2.0)
    h2 = z @ f32(params["w4"]) + f32(params["b4"])
    x_rec = jax.nn.sigmoid(h2 @ f32(params["w5"]) + f32(params["b5"]))
    return x_rec, mu, sigma


if __name__ == "__main__":
    # Small flattened-image VAE shapes; batch large enough that the auto-sized
    # batch tile gives a 2-step "parallel" grid (keeps both v7x TensorCores busy).
    B, INPUT_DIM, Z_DIM, H_DIM = 256, 64, 16, 32

    key = jax.random.PRNGKey(0)
    k_x, k_eps, k_p = jax.random.split(key, 3)

    x = jax.random.uniform(k_x, (B, INPUT_DIM), jnp.float32)     # "image" input
    eps = jax.random.normal(k_eps, (B, Z_DIM), jnp.float32)      # randn_like(std)
    params = init_params(k_p, INPUT_DIM, Z_DIM, H_DIM)           # f32 (bf16 supported via dtype=)

    x_rec, mu, sigma = jax.block_until_ready(vae_forward(x, eps, params))

    x_rec_ref, mu_ref, sigma_ref = vae_forward_ref(x, eps, params)
    assert jnp.allclose(mu, mu_ref, atol=1e-5, rtol=1e-5)
    assert jnp.allclose(sigma, sigma_ref, atol=1e-5, rtol=1e-5)
    # x_rec uses approx reciprocal (EUP) in the fused sigmoid -> loosen tolerance a bit
    assert jnp.allclose(x_rec, x_rec_ref, atol=1e-2, rtol=1e-2)

    print("KERNEL_OK")
</pallas_src>

<mosaic_0001>
module attributes {stable_mosaic.version = 11 : i64} {
  func.func @_vae_kernel(%arg0: i32, %arg1: memref<128x64xf32, #tpu.memory_space<vmem>>, %arg2: memref<128x16xf32, #tpu.memory_space<vmem>>, %arg3: memref<64x32xf32, #tpu.memory_space<vmem>>, %arg4: memref<1x32xf32, #tpu.memory_space<vmem>>, %arg5: memref<32x128xf32, #tpu.memory_space<vmem>>, %arg6: memref<1x128xf32, #tpu.memory_space<vmem>>, %arg7: memref<16x32xf32, #tpu.memory_space<vmem>>, %arg8: memref<1x32xf32, #tpu.memory_space<vmem>>, %arg9: memref<32x128xf32, #tpu.memory_space<vmem>>, %arg10: memref<1x128xf32, #tpu.memory_space<vmem>>, %arg11: memref<128x128xf32, #tpu.memory_space<vmem>>, %arg12: memref<128x128xf32, #tpu.memory_space<vmem>>) attributes {dimension_semantics = [#tpu.dimension_semantics<parallel>], iteration_bounds = array<i64: 2>, scalar_prefetch = 0 : i64, scratch_operands = 0 : i64, tpu.core_type = #tpu.core_type<tc>, window_params = [{transform_indices = @transform_0, window_bounds = array<i64: 128, 64>}, {transform_indices = @transform_1, window_bounds = array<i64: 128, 16>}, {pipeline_mode = #tpu.pipeline_mode<synchronous>, transform_indices = @transform_2, window_bounds = array<i64: 64, 32>}, {pipeline_mode = #tpu.pipeline_mode<synchronous>, transform_indices = @transform_3, window_bounds = array<i64: 1, 32>}, {pipeline_mode = #tpu.pipeline_mode<synchronous>, transform_indices = @transform_4, window_bounds = array<i64: 32, 128>}, {pipeline_mode = #tpu.pipeline_mode<synchronous>, transform_indices = @transform_5, window_bounds = array<i64: 1, 128>}, {pipeline_mode = #tpu.pipeline_mode<synchronous>, transform_indices = @transform_6, window_bounds = array<i64: 16, 32>}, {pipeline_mode = #tpu.pipeline_mode<synchronous>, transform_indices = @transform_7, window_bounds = array<i64: 1, 32>}, {pipeline_mode = #tpu.pipeline_mode<synchronous>, transform_indices = @transform_8, window_bounds = array<i64: 32, 128>}, {pipeline_mode = #tpu.pipeline_mode<synchronous>, transform_indices = @transform_9, window_bounds = array<i64: 1, 128>}, {transform_indices = @transform_10, window_bounds = array<i64: 128, 128>}, {transform_indices = @transform_11, window_bounds = array<i64: 128, 128>}]} {
    %c0 = arith.constant 0 : index
    %c0_0 = arith.constant 0 : index
    %0 = vector.load %arg1[%c0, %c0_0] : memref<128x64xf32, #tpu.memory_space<vmem>>, vector<128x64xf32>
    %c0_1 = arith.constant 0 : index
    %c0_2 = arith.constant 0 : index
    %1 = vector.load %arg3[%c0_1, %c0_2] : memref<64x32xf32, #tpu.memory_space<vmem>>, vector<64x32xf32>
    %cst = arith.constant dense<0.000000e+00> : vector<128x32xf32>
    %2 = tpu.matmul %0, %1, %cst {dimension_numbers = #tpu.dot_dimension_numbers<[1], [0], [0], [1], [0, 0, 1, 1], [], []>} : vector<128x64xf32>, vector<64x32xf32>, vector<128x32xf32> -> vector<128x32xf32>
    %c0_3 = arith.constant 0 : index
    %c0_4 = arith.constant 0 : index
    %3 = vector.load %arg4[%c0_3, %c0_4] : memref<1x32xf32, #tpu.memory_space<vmem>>, vector<1x32xf32>
    %4 = vector.broadcast %3 : vector<1x32xf32> to vector<128x32xf32>
    %5 = arith.addf %2, %4 : vector<128x32xf32>
    %cst_5 = arith.constant 0.000000e+00 : f32
    %6 = vector.broadcast %cst_5 : f32 to vector<128x32xf32>
    %7 = arith.maximumf %5, %6 : vector<128x32xf32>
    %c0_6 = arith.constant 0 : index
    %c0_7 = arith.constant 0 : index
    %8 = vector.load %arg5[%c0_6, %c0_7] : memref<32x128xf32, #tpu.memory_space<vmem>>, vector<32x128xf32>
    %cst_8 = arith.constant dense<0.000000e+00> : vector<128x128xf32>
    %9 = tpu.matmul %7, %8, %cst_8 {dimension_numbers = #tpu.dot_dimension_numbers<[1], [0], [0], [1], [0, 0, 1, 1], [], []>} : vector<128x32xf32>, vector<32x128xf32>, vector<128x128xf32> -> vector<128x128xf32>
    %c0_9 = arith.constant 0 : index
    %c0_10 = arith.constant 0 : index
    %10 = vector.load %arg6[%c0_9, %c0_10] : memref<1x128xf32, #tpu.memory_space<vmem>>, vector<1x128xf32>
    %11 = vector.broadcast %10 : vector<1x128xf32> to vector<128x128xf32>
    %12 = arith.addf %9, %11 : vector<128x128xf32>
    %13 = vector.extract_strided_slice %12 {offsets = [0, 0], sizes = [128, 16], strides = [1, 1]} : vector<128x128xf32> to vector<128x16xf32>
    %14 = vector.extract_strided_slice %12 {offsets = [0, 16], sizes = [128, 16], strides = [1, 1]} : vector<128x128xf32> to vector<128x16xf32>
    %c0_11 = arith.constant 0 : index
    %c0_12 = arith.constant 0 : index
    %15 = vector.load %arg2[%c0_11, %c0_12] : memref<128x16xf32, #tpu.memory_space<vmem>>, vector<128x16xf32>
    %cst_13 = arith.constant 5.000000e-01 : f32
    %16 = vector.broadcast %cst_13 : f32 to vector<128x16xf32>
    %17 = arith.mulf %14, %16 : vector<128x16xf32>
    %18 = math.exp %17 : vector<128x16xf32>
    %19 = arith.mulf %15, %18 : vector<128x16xf32>
    %20 = arith.addf %13, %19 : vector<128x16xf32>
    %c0_14 = arith.constant 0 : index
    %c0_15 = arith.constant 0 : index
    %21 = vector.load %arg7[%c0_14, %c0_15] : memref<16x32xf32, #tpu.memory_space<vmem>>, vector<16x32xf32>
    %cst_16 = arith.constant dense<0.000000e+00> : vector<128x32xf32>
    %22 = tpu.matmul %20, %21, %cst_16 {dimension_numbers = #tpu.dot_dimension_numbers<[1], [0], [0], [1], [0, 0, 1, 1], [], []>} : vector<128x16xf32>, vector<16x32xf32>, vector<128x32xf32> -> vector<128x32xf32>
    %c0_17 = arith.constant 0 : index
    %c0_18 = arith.constant 0 : index
    %23 = vector.load %arg8[%c0_17, %c0_18] : memref<1x32xf32, #tpu.memory_space<vmem>>, vector<1x32xf32>
    %24 = vector.broadcast %23 : vector<1x32xf32> to vector<128x32xf32>
    %25 = arith.addf %22, %24 : vector<128x32xf32>
    %c0_19 = arith.constant 0 : index
    %c0_20 = arith.constant 0 : index
    %26 = vector.load %arg9[%c0_19, %c0_20] : memref<32x128xf32, #tpu.memory_space<vmem>>, vector<32x128xf32>
    %cst_21 = arith.constant dense<0.000000e+00> : vector<128x128xf32>
    %27 = tpu.matmul %25, %26, %cst_21 {dimension_numbers = #tpu.dot_dimension_numbers<[1], [0], [0], [1], [0, 0, 1, 1], [], []>} : vector<128x32xf32>, vector<32x128xf32>, vector<128x128xf32> -> vector<128x128xf32>
    %c0_22 = arith.constant 0 : index
    %c0_23 = arith.constant 0 : index
    %28 = vector.load %arg10[%c0_22, %c0_23] : memref<1x128xf32, #tpu.memory_space<vmem>>, vector<1x128xf32>
    %29 = vector.broadcast %28 : vector<1x128xf32> to vector<128x128xf32>
    %30 = arith.addf %27, %29 : vector<128x128xf32>
    %cst_24 = arith.constant 0.000000e+00 : f32
    %31 = vector.broadcast %cst_24 : f32 to vector<128x128xf32>
    %32 = arith.subf %31, %30 : vector<128x128xf32>
    %33 = math.exp %32 : vector<128x128xf32>
    %cst_25 = arith.constant 1.000000e+00 : f32
    %34 = vector.broadcast %cst_25 : f32 to vector<128x128xf32>
    %35 = arith.addf %34, %33 : vector<128x128xf32>
    %36 = tpu.reciprocal %35 {approx = true} : vector<128x128xf32> -> vector<128x128xf32>
    %c0_26 = arith.constant 0 : index
    %c0_27 = arith.constant 0 : index
    %37 = vector.load %arg11[%c0_26, %c0_27] : memref<128x128xf32, #tpu.memory_space<vmem>>, vector<128x128xf32>
    tpu.vector_store %arg11[%c0_26, %c0_27], %36 {strides = array<i32>} : memref<128x128xf32, #tpu.memory_space<vmem>>, vector<128x128xf32>,
    %c0_28 = arith.constant 0 : index
    %c0_29 = arith.constant 0 : index
    %38 = vector.load %arg12[%c0_28, %c0_29] : memref<128x128xf32, #tpu.memory_space<vmem>>, vector<128x128xf32>
    tpu.vector_store %arg12[%c0_28, %c0_29], %12 {strides = array<i32>} : memref<128x128xf32, #tpu.memory_space<vmem>>, vector<128x128xf32>,
    return
  }
  func.func @transform_0(%arg0: i32) -> (i32, i32) {
    %c0_i32 = arith.constant 0 : i32
    %c0_i32_0 = arith.constant 0 : i32
    return %arg0, %c0_i32 : i32, i32
  }
  func.func @transform_1(%arg0: i32) -> (i32, i32) {
    %c0_i32 = arith.constant 0 : i32
    %c0_i32_0 = arith.constant 0 : i32
    return %arg0, %c0_i32 : i32, i32
  }
  func.func @transform_2(%arg0: i32) -> (i32, i32) {
    %c0_i32 = arith.constant 0 : i32
    %c0_i32_0 = arith.constant 0 : i32
    %c0_i32_1 = arith.constant 0 : i32
    return %c0_i32, %c0_i32_0 : i32, i32
  }
  func.func @transform_3(%arg0: i32) -> (i32, i32) {
    %c0_i32 = arith.constant 0 : i32
    %c0_i32_0 = arith.constant 0 : i32
    %c0_i32_1 = arith.constant 0 : i32
    return %c0_i32, %c0_i32_0 : i32, i32
  }
  func.func @transform_4(%arg0: i32) -> (i32, i32) {
    %c0_i32 = arith.constant 0 : i32
    %c0_i32_0 = arith.constant 0 : i32
    %c0_i32_1 = arith.constant 0 : i32
    return %c0_i32, %c0_i32_0 : i32, i32
  }
  func.func @transform_5(%arg0: i32) -> (i32, i32) {
    %c0_i32 = arith.constant 0 : i32
    %c0_i32_0 = arith.constant 0 : i32
    %c0_i32_1 = arith.constant 0 : i32
    return %c0_i32, %c0_i32_0 : i32, i32
  }
  func.func @transform_6(%arg0: i32) -> (i32, i32) {
    %c0_i32 = arith.constant 0 : i32
    %c0_i32_0 = arith.constant 0 : i32
    %c0_i32_1 = arith.constant 0 : i32
    return %c0_i32, %c0_i32_0 : i32, i32
  }
  func.func @transform_7(%arg0: i32) -> (i32, i32) {
    %c0_i32 = arith.constant 0 : i32
    %c0_i32_0 = arith.constant 0 : i32
    %c0_i32_1 = arith.constant 0 : i32
    return %c0_i32, %c0_i32_0 : i32, i32
  }
  func.func @transform_8(%arg0: i32) -> (i32, i32) {
    %c0_i32 = arith.constant 0 : i32
    %c0_i32_0 = arith.constant 0 : i32
    %c0_i32_1 = arith.constant 0 : i32
    return %c0_i32, %c0_i32_0 : i32, i32
  }
  func.func @transform_9(%arg0: i32) -> (i32, i32) {
    %c0_i32 = arith.constant 0 : i32
    %c0_i32_0 = arith.constant 0 : i32
    %c0_i32_1 = arith.constant 0 : i32
    return %c0_i32, %c0_i32_0 : i32, i32
  }
  func.func @transform_10(%arg0: i32) -> (i32, i32) {
    %c0_i32 = arith.constant 0 : i32
    %c0_i32_0 = arith.constant 0 : i32
    return %arg0, %c0_i32 : i32, i32
  }
  func.func @transform_11(%arg0: i32) -> (i32, i32) {
    %c0_i32 = arith.constant 0 : i32
    %c0_i32_0 = arith.constant 0 : i32
    return %arg0, %c0_i32 : i32, i32
  }
}

</mosaic_0001>

<llo_original>
// kernel: tpu_custom_call.1
$region0: #{tpu_custom_call.1}
  #allocation0 [shape = 'u32[]', space=smem, size = 0x4, offset = 0x4, fixed_abs, tag = 'smem constant byte address 0x4 - core index']
  #allocation1 [shape = 'u32[144,128]{1,0:T(1,128)}', space=vmem, size = 0x12000, scoped, tag = 'internal scratch']
  %s0 = inlined_call_operand.vmem [shape: f32[256,64], index: 0, kind: input, shape index: {}]
  %s1 = inlined_call_operand.vmem [shape: f32[256,16], index: 1, kind: input, shape index: {}]
  %s2 = inlined_call_operand.vmem [shape: f32[64,32], index: 2, kind: input, shape index: {}]
  %s3 = inlined_call_operand.vmem [shape: f32[1,32], index: 3, kind: input, shape index: {}]
  %s4 = inlined_call_operand.vmem [shape: f32[32,128], index: 4, kind: input, shape index: {}]
  %s5 = inlined_call_operand.vmem [shape: f32[1,128], index: 5, kind: input, shape index: {}]
  %s6 = inlined_call_operand.vmem [shape: f32[16,32], index: 6, kind: input, shape index: {}]
  %s7 = inlined_call_operand.vmem [shape: f32[1,32], index: 7, kind: input, shape index: {}]
  %s8 = inlined_call_operand.vmem [shape: f32[32,128], index: 8, kind: input, shape index: {}]
  %s9 = inlined_call_operand.vmem [shape: f32[1,128], index: 9, kind: input, shape index: {}]
  %s10 = inlined_call_operand.hbm [shape: f32[256,128], index: 10, kind: output, shape index: {0}]
  %s11 = inlined_call_operand.hbm [shape: f32[256,128], index: 11, kind: output, shape index: {1}]
  %12 = xla_tuple %s10, %s11
  %s13 = sld [smem:[#allocation0]]
  $region81: #{tpu_custom_call.1} parent=0
    _
  %s15 = ssub.s32 1, %s13
  %s16 = scalar_select 0, %s15, %s13
  $region1: #{tpu_custom_call.1} parent=0
    #allocation2 [shape = 'u8[131072]{0}', space=vmem, size = 0x20000, scoped, tag = 'output window, operand 0']
    #allocation3 [shape = 's32[2]{0}', space=sflag, size = 0x8, scoped, tag = 'scoped memory for tpu_custom_call.1']
    #allocation4 [shape = 'u8[131072]{0}', space=vmem, size = 0x20000, scoped, tag = 'output window, operand 1']
    #allocation5 [shape = 's32[2]{0}', space=sflag, size = 0x8, scoped, tag = 'scoped memory for tpu_custom_call.1']
    %17 = vsyncpa [#allocation3], 0
    %s18 = scalar_lea.sflag [#allocation3], 1
    %19 = vsyncpa %s18, 0
    %20 = vsyncpa [#allocation5], 0
    %s21 = scalar_lea.sflag [#allocation5], 1
    %22 = vsyncpa %s21, 0
    loop: start=0, step=1, limit=4
    $region2: #{tpu_custom_call.1} parent=1 // loop_pre_header
      _
    $region3: #{tpu_custom_call.1} parent=1 // loop_header
      %s24 = sphi 0, %s28
      %p25 = scmp.ge.s32.totalorder %s24, 4
      %s34 = sphi 0, %s36
      %s37 = sphi 0, %s34
      %s38 = sphi 0, %s37
      %s54 = sphi 0, %s38
      %s60 = sphi 0, %s62
      %s63 = sphi 0, %s60
      %s64 = sphi 0, %s63
      %s80 = sphi 0, %s64
      %s84 = sphi 0, %s84
      %s86 = sphi 0, %s84
      %s87 = sphi 0, %s86
      %s101 = sphi 0, %s87
      %s105 = sphi 0, %s105
      %s107 = sphi 0, %s105
      %s108 = sphi 0, %s107
      %s122 = sphi 0, %s108
      %s126 = sphi 0, %s126
      %s128 = sphi 0, %s126
      %s129 = sphi 0, %s128
      %s143 = sphi 0, %s129
      %s147 = sphi 0, %s147
      %s149 = sphi 0, %s147
      %s150 = sphi 0, %s149
      %s164 = sphi 0, %s150
      %s168 = sphi 0, %s168
      %s170 = sphi 0, %s168
      %s171 = sphi 0, %s170
      %s185 = sphi 0, %s171
      %s189 = sphi 0, %s189
      %s191 = sphi 0, %s189
      %s192 = sphi 0, %s191
      %s206 = sphi 0, %s192
      %s210 = sphi 0, %s210
      %s212 = sphi 0, %s210
      %s213 = sphi 0, %s212
      %s227 = sphi 0, %s213
      %s231 = sphi 0, %s231
      %s233 = sphi 0, %s231
      %s234 = sphi 0, %s233
      %s248 = sphi 0, %s234
      %s254 = sphi 0, %s256
      %s257 = sphi 0, %s254
      %s258 = sphi 0, %s257
      %s274 = sphi 0, %s258
      %s280 = sphi 0, %s282
      %s283 = sphi 0, %s280
      %s284 = sphi 0, %s283
      %s300 = sphi 0, %s284
    $region4: #{tpu_custom_call.1} parent=1 // loop_header_branch
      %27 = sbr.rel (%p25) target = $region8
    $region5: #{tpu_custom_call.1} parent=1 // loop_body
      %s29 = ssub.s32 %s24, 1
      %s30 = ssub.s32 %s24, 2
      %s31 = sadd.s32 %s24, 1
      %s32 = ssub.s32 %s24, %s31
      %p33 = scmp.eq.s32.totalorder %s32, 0
      %s35 = sadd.s32 %s34, 1
      %s36 = scalar_select %p33, %s34, %s35
      %p39 = pneg %p33
      %p40 = scmp.eq.s32.totalorder %s24, 1
      %p41 = por %p39, %p40
      %p42 = scmp.ne.s32.totalorder %s34, %s37
      %p43 = scmp.eq.s32.totalorder %s24, 0
      %p44 = por %p42, %p43
      %p45 = scmp.ne.s32.totalorder %s34, %s37
      %p46 = scmp.eq.s32.totalorder %s29, 1
      %p47 = por %p45, %p46
      %p48 = scmp.ne.s32.totalorder %s37, %s38
      %p49 = scmp.eq.s32.totalorder %s29, 0
      %p50 = por %p48, %p49
      %p51 = scmp.ne.s32.totalorder %s37, %s38
      %p52 = scmp.eq.s32.totalorder %s30, 1
      %p53 = por %p51, %p52
      %p55 = scmp.ne.s32.totalorder %s38, %s54
      %p56 = scmp.eq.s32.totalorder %s30, 0
      %p57 = por %p55, %p56
      %s58 = ssub.s32 %s24, %s31
      %p59 = scmp.eq.s32.totalorder %s58, 0
      %s61 = sadd.s32 %s60, 1
      %s62 = scalar_select %p59, %s60, %s61
      %p65 = pneg %p59
      %p66 = scmp.eq.s32.totalorder %s24, 1
      %p67 = por %p65, %p66
      %p68 = scmp.ne.s32.totalorder %s60, %s63
      %p69 = scmp.eq.s32.totalorder %s24, 0
      %p70 = por %p68, %p69
      %p71 = scmp.ne.s32.totalorder %s60, %s63
      %p72 = scmp.eq.s32.totalorder %s29, 1
      %p73 = por %p71, %p72
      %p74 = scmp.ne.s32.totalorder %s63, %s64
      %p75 = scmp.eq.s32.totalorder %s29, 0
      %p76 = por %p74, %p75
      %p77 = scmp.ne.s32.totalorder %s63, %s64
      %p78 = scmp.eq.s32.totalorder %s30, 1
      %p79 = por %p77, %p78
      %p81 = scmp.ne.s32.totalorder %s64, %s80
      %p82 = scmp.eq.s32.totalorder %s30, 0
      %p83 = por %p81, %p82
      %s85 = sadd.s32 %s84, 1
      %p88 = scmp.eq.s32.totalorder %s24, 1
      %p89 = scmp.ne.s32.totalorder %s84, %s86
      %p90 = scmp.eq.s32.totalorder %s24, 0
      %p91 = por %p89, %p90
      %p92 = scmp.ne.s32.totalorder %s84, %s86
      %p93 = scmp.eq.s32.totalorder %s29, 1
      %p94 = por %p92, %p93
      %p95 = scmp.ne.s32.totalorder %s86, %s87
      %p96 = scmp.eq.s32.totalorder %s29, 0
      %p97 = por %p95, %p96
      %p98 = scmp.ne.s32.totalorder %s86, %s87
      %p99 = scmp.eq.s32.totalorder %s30, 1
      %p100 = por %p98, %p99
      %p102 = scmp.ne.s32.totalorder %s87, %s101
      %p103 = scmp.eq.s32.totalorder %s30, 0
      %p104 = por %p102, %p103
      %s106 = sadd.s32 %s105, 1
      %p109 = scmp.eq.s32.totalorder %s24, 1
      %p110 = scmp.ne.s32.totalorder %s105, %s107
      %p111 = scmp.eq.s32.totalorder %s24, 0
      %p112 = por %p110, %p111
      %p113 = scmp.ne.s32.totalorder %s105, %s107
      %p114 = scmp.eq.s32.totalorder %s29, 1
      %p115 = por %p113, %p114
      %p116 = scmp.ne.s32.totalorder %s107, %s108
      %p117 = scmp.eq.s32.totalorder %s29, 0
      %p118 = por %p116, %p117
      %p119 = scmp.ne.s32.totalorder %s107, %s108
      %p120 = scmp.eq.s32.totalorder %s30, 1
      %p121 = por %p119, %p120
      %p123 = scmp.ne.s32.totalorder %s108, %s122
      %p124 = scmp.eq.s32.totalorder %s30, 0
      %p125 = por %p123, %p124
      %s127 = sadd.s32 %s126, 1
      %p130 = scmp.eq.s32.totalorder %s24, 1
      %p131 = scmp.ne.s32.totalorder %s126, %s128
      %p132 = scmp.eq.s32.totalorder %s24, 0
      %p133 = por %p131, %p132
      %p134 = scmp.ne.s32.totalorder %s126, %s128
      %p135 = scmp.eq.s32.totalorder %s29, 1
      %p136 = por %p134, %p135
      %p137 = scmp.ne.s32.totalorder %s128, %s129
      %p138 = scmp.eq.s32.totalorder %s29, 0
      %p139 = por %p137, %p138
      %p140 = scmp.ne.s32.totalorder %s128, %s129
      %p141 = scmp.eq.s32.totalorder %s30, 1
      %p142 = por %p140, %p141
      %p144 = scmp.ne.s32.totalorder %s129, %s143
      %p145 = scmp.eq.s32.totalorder %s30, 0
      %p146 = por %p144, %p145
      %s148 = sadd.s32 %s147, 1
      %p151 = scmp.eq.s32.totalorder %s24, 1
      %p152 = scmp.ne.s32.totalorder %s147, %s149
      %p153 = scmp.eq.s32.totalorder %s24, 0
      %p154 = por %p152, %p153
      %p155 = scmp.ne.s32.totalorder %s147, %s149
      %p156 = scmp.eq.s32.totalorder %s29, 1
      %p157 = por %p155, %p156
      %p158 = scmp.ne.s32.totalorder %s149, %s150
      %p159 = scmp.eq.s32.totalorder %s29, 0
      %p160 = por %p158, %p159
      %p161 = scmp.ne.s32.totalorder %s149, %s150
      %p162 = scmp.eq.s32.totalorder %s30, 1
      %p163 = por %p161, %p162
      %p165 = scmp.ne.s32.totalorder %s150, %s164
      %p166 = scmp.eq.s32.totalorder %s30, 0
      %p167 = por %p165, %p166
      %s169 = sadd.s32 %s168, 1
      %p172 = scmp.eq.s32.totalorder %s24, 1
      %p173 = scmp.ne.s32.totalorder %s168, %s170
      %p174 = scmp.eq.s32.totalorder %s24, 0
      %p175 = por %p173, %p174
      %p176 = scmp.ne.s32.totalorder %s168, %s170
      %p177 = scmp.eq.s32.totalorder %s29, 1
      %p178 = por %p176, %p177
      %p179 = scmp.ne.s32.totalorder %s170, %s171
      %p180 = scmp.eq.s32.totalorder %s29, 0
      %p181 = por %p179, %p180
      %p182 = scmp.ne.s32.totalorder %s170, %s171
      %p183 = scmp.eq.s32.totalorder %s30, 1
      %p184 = por %p182, %p183
      %p186 = scmp.ne.s32.totalorder %s171, %s185
      %p187 = scmp.eq.s32.totalorder %s30, 0
      %p188 = por %p186, %p187
      %s190 = sadd.s32 %s189, 1
      %p193 = scmp.eq.s32.totalorder %s24, 1
      %p194 = scmp.ne.s32.totalorder %s189, %s191
      %p195 = scmp.eq.s32.totalorder %s24, 0
      %p196 = por %p194, %p195
      %p197 = scmp.ne.s32.totalorder %s189, %s191
      %p198 = scmp.eq.s32.totalorder %s29, 1
      %p199 = por %p197, %p198
      %p200 = scmp.ne.s32.totalorder %s191, %s192
      %p201 = scmp.eq.s32.totalorder %s29, 0
      %p202 = por %p200, %p201
      %p203 = scmp.ne.s32.totalorder %s191, %s192
      %p204 = scmp.eq.s32.totalorder %s30, 1
      %p205 = por %p203, %p204
      %p207 = scmp.ne.s32.totalorder %s192, %s206
      %p208 = scmp.eq.s32.totalorder %s30, 0
      %p209 = por %p207, %p208
      %s211 = sadd.s32 %s210, 1
      %p214 = scmp.eq.s32.totalorder %s24, 1
      %p215 = scmp.ne.s32.totalorder %s210, %s212
      %p216 = scmp.eq.s32.totalorder %s24, 0
      %p217 = por %p215, %p216
      %p218 = scmp.ne.s32.totalorder %s210, %s212
      %p219 = scmp.eq.s32.totalorder %s29, 1
      %p220 = por %p218, %p219
      %p221 = scmp.ne.s32.totalorder %s212, %s213
      %p222 = scmp.eq.s32.totalorder %s29, 0
      %p223 = por %p221, %p222
      %p224 = scmp.ne.s32.totalorder %s212, %s213
      %p225 = scmp.eq.s32.totalorder %s30, 1
      %p226 = por %p224, %p225
      %p228 = scmp.ne.s32.totalorder %s213, %s227
      %p229 = scmp.eq.s32.totalorder %s30, 0
      %p230 = por %p228, %p229
      %s232 = sadd.s32 %s231, 1
      %p235 = scmp.eq.s32.totalorder %s24, 1
      %p236 = scmp.ne.s32.totalorder %s231, %s233
      %p237 = scmp.eq.s32.totalorder %s24, 0
      %p238 = por %p236, %p237
      %p239 = scmp.ne.s32.totalorder %s231, %s233
      %p240 = scmp.eq.s32.totalorder %s29, 1
      %p241 = por %p239, %p240
      %p242 = scmp.ne.s32.totalorder %s233, %s234
      %p243 = scmp.eq.s32.totalorder %s29, 0
      %p244 = por %p242, %p243
      %p245 = scmp.ne.s32.totalorder %s233, %s234
      %p246 = scmp.eq.s32.totalorder %s30, 1
      %p247 = por %p245, %p246
      %p249 = scmp.ne.s32.totalorder %s234, %s248
      %p250 = scmp.eq.s32.totalorder %s30, 0
      %p251 = por %p249, %p250
      %s252 = ssub.s32 %s24, %s31
      %p253 = scmp.eq.s32.totalorder %s252, 0
      %s255 = sadd.s32 %s254, 1
      %s256 = scalar_select %p253, %s254, %s255
      %p259 = pneg %p253
      %p260 = scmp.eq.s32.totalorder %s24, 1
      %p261 = por %p259, %p260
      %p262 = scmp.ne.s32.totalorder %s254, %s257
      %p263 = scmp.eq.s32.totalorder %s24, 0
      %p264 = por %p262, %p263
      %p265 = scmp.ne.s32.totalorder %s254, %s257
      %p266 = scmp.eq.s32.totalorder %s29, 1
      %p267 = por %p265, %p266
      %p268 = scmp.ne.s32.totalorder %s257, %s258
      %p269 = scmp.eq.s32.totalorder %s29, 0
      %p270 = por %p268, %p269
      %p271 = scmp.ne.s32.totalorder %s257, %s258
      %p272 = scmp.eq.s32.totalorder %s30, 1
      %p273 = por %p271, %p272
      %p275 = scmp.ne.s32.totalorder %s258, %s274
      %p276 = scmp.eq.s32.totalorder %s30, 0
      %p277 = por %p275, %p276
      %s278 = ssub.s32 %s24, %s31
      %p279 = scmp.eq.s32.totalorder %s278, 0
      %s281 = sadd.s32 %s280, 1
      %s282 = scalar_select %p279, %s280, %s281
      %p285 = pneg %p279
      %p286 = scmp.eq.s32.totalorder %s24, 1
      %p287 = por %p285, %p286
      %p288 = scmp.ne.s32.totalorder %s280, %s283
      %p289 = scmp.eq.s32.totalorder %s24, 0
      %p290 = por %p288, %p289
      %p291 = scmp.ne.s32.totalorder %s280, %s283
      %p292 = scmp.eq.s32.totalorder %s29, 1
      %p293 = por %p291, %p292
      %p294 = scmp.ne.s32.totalorder %s283, %s284
      %p295 = scmp.eq.s32.totalorder %s29, 0
      %p296 = por %p294, %p295
      %p297 = scmp.ne.s32.totalorder %s283, %s284
      %p298 = scmp.eq.s32.totalorder %s30, 1
      %p299 = por %p297, %p298
      %p301 = scmp.ne.s32.totalorder %s284, %s300
      %p302 = scmp.eq.s32.totalorder %s30, 0
      %p303 = por %p301, %p302
      %p304 = scmp.le.s32.totalorder 1, %s24
      %p305 = scmp.lt.s32.totalorder %s24, 3
      %p306 = pnand %p304, %p305
      %p307 = pneg %p306
      // Predicated region
      $region9: #{tpu_custom_call.1} parent=5 // pred_check
        _
      $region10: #{tpu_custom_call.1} parent=5 // pred_check_branch
        %309 = sbr.rel (%p306) target = $region12
      $region11: #{tpu_custom_call.1} parent=5 // pred_region
        %s310 = ssub.s32 %s24, 1
        // Predicated region
        $region13: #{tpu_custom_call.1} parent=11 // pred_check
          %p311 = pneg %p97
        $region14: #{tpu_custom_call.1} parent=11 // pred_check_branch
          %313 = sbr.rel (%p311) target = $region16
        $region15: #{tpu_custom_call.1} parent=11 // pred_region
          _
        $region16: #{tpu_custom_call.1} parent=11 // pred_fallthru
          _
        // Predicated region
        $region17: #{tpu_custom_call.1} parent=11 // pred_check
          %p314 = pneg %p118
        $region18: #{tpu_custom_call.1} parent=11 // pred_check_branch
          %316 = sbr.rel (%p314) target = $region20
        $region19: #{tpu_custom_call.1} parent=11 // pred_region
          _
        $region20: #{tpu_custom_call.1} parent=11 // pred_fallthru
          _
        // Predicated region
        $region21: #{tpu_custom_call.1} parent=11 // pred_check
          %p317 = pneg %p139
        $region22: #{tpu_custom_call.1} parent=11 // pred_check_branch
          %319 = sbr.rel (%p317) target = $region24
        $region23: #{tpu_custom_call.1} parent=11 // pred_region
          _
        $region24: #{tpu_custom_call.1} parent=11 // pred_fallthru
          _
        // Predicated region
        $region25: #{tpu_custom_call.1} parent=11 // pred_check
          %p320 = pneg %p160
        $region26: #{tpu_custom_call.1} parent=11 // pred_check_branch
          %322 = sbr.rel (%p320) target = $region28
        $region27: #{tpu_custom_call.1} parent=11 // pred_region
          _
        $region28: #{tpu_custom_call.1} parent=11 // pred_fallthru
          _
        // Predicated region
        $region29: #{tpu_custom_call.1} parent=11 // pred_check
          %p323 = pneg %p181
        $region30: #{tpu_custom_call.1} parent=11 // pred_check_branch
          %325 = sbr.rel (%p323) target = $region32
        $region31: #{tpu_custom_call.1} parent=11 // pred_region
          _
        $region32: #{tpu_custom_call.1} parent=11 // pred_fallthru
          _
        // Predicated region
        $region33: #{tpu_custom_call.1} parent=11 // pred_check
          %p326 = pneg %p202
        $region34: #{tpu_custom_call.1} parent=11 // pred_check_branch
          %328 = sbr.rel (%p326) target = $region36
        $region35: #{tpu_custom_call.1} parent=11 // pred_region
          _
        $region36: #{tpu_custom_call.1} parent=11 // pred_fallthru
          _
        // Predicated region
        $region37: #{tpu_custom_call.1} parent=11 // pred_check
          %p329 = pneg %p223
        $region38: #{tpu_custom_call.1} parent=11 // pred_check_branch
          %331 = sbr.rel (%p329) target = $region40
        $region39: #{tpu_custom_call.1} parent=11 // pred_region
          _
        $region40: #{tpu_custom_call.1} parent=11 // pred_fallthru
          _
        // Predicated region
        $region41: #{tpu_custom_call.1} parent=11 // pred_check
          %p332 = pneg %p244
        $region42: #{tpu_custom_call.1} parent=11 // pred_check_branch
          %334 = sbr.rel (%p332) target = $region44
        $region43: #{tpu_custom_call.1} parent=11 // pred_region
          _
        $region44: #{tpu_custom_call.1} parent=11 // pred_fallthru
          _
      $region12: #{tpu_custom_call.1} parent=5 // pred_fallthru
        _
      %p335 = scmp.lt.s32.totalorder %s24, 2
      // Predicated region
      $region45: #{tpu_custom_call.1} parent=5 // pred_check
        %p336 = pneg %p335
      $region46: #{tpu_custom_call.1} parent=5 // pred_check_branch
        %338 = sbr.rel (%p336) target = $region48
      $region47: #{tpu_custom_call.1} parent=5 // pred_region
        // Predicated region
        $region49: #{tpu_custom_call.1} parent=47 // pred_check
          %p339 = pneg %p44
        $region50: #{tpu_custom_call.1} parent=47 // pred_check_branch
          %341 = sbr.rel (%p339) target = $region52
        $region51: #{tpu_custom_call.1} parent=47 // pred_region
          %s342 = smul.u32 16, %s24
          %p343 = scmp.lt.s32.totalorder %s342, 31
          %s344 = scalar_select %p343, %s342, 31
          %s345 = smul.addr %s344, 8
          %s346 = scalar_lea.vmem %s0, %s345
          %s347 = smul.u32 16, %s24
        $region52: #{tpu_custom_call.1} parent=47 // pred_fallthru
          _
        // Predicated region
        $region53: #{tpu_custom_call.1} parent=47 // pred_check
          %p348 = pneg %p70
        $region54: #{tpu_custom_call.1} parent=47 // pred_check_branch
          %350 = sbr.rel (%p348) target = $region56
        $region55: #{tpu_custom_call.1} parent=47 // pred_region
          %s351 = smul.u32 16, %s24
          %p352 = scmp.lt.s32.totalorder %s351, 31
          %s353 = scalar_select %p352, %s351, 31
          %s354 = smul.addr %s353, 8
          %s355 = scalar_lea.vmem %s1, %s354
          %s356 = smul.u32 16, %s24
        $region56: #{tpu_custom_call.1} parent=47 // pred_fallthru
          _
      $region48: #{tpu_custom_call.1} parent=5 // pred_fallthru
        _
      %p357 = scmp.le.s32.totalorder 1, %s24
      %p358 = scmp.lt.s32.totalorder %s24, 3
      %p359 = pnand %p357, %p358
      %p360 = pneg %p359
      // Predicated region
      $region57: #{tpu_custom_call.1} parent=5 // pred_check
        _
      $region58: #{tpu_custom_call.1} parent=5 // pred_check_branch
        %362 = sbr.rel (%p359) target = $region60
      $region59: #{tpu_custom_call.1} parent=5 // pred_region
        %s363 = ssub.s32 %s24, 1
        %s364 = smul.u32 16, %s29
        %p365 = scmp.lt.s32.totalorder %s364, 31
        %s366 = scalar_select %p365, %s364, 31
        %s367 = smul.addr %s366, 8
        %s368 = scalar_lea.vmem %s0, %s367
        %p369 = pneg %p50
        %p370 = pneg %p47
        %s371 = smul.u32 16, %s29
        %p372 = scmp.lt.s32.totalorder %s371, 31
        %s373 = scalar_select %p372, %s371, 31
        %s374 = smul.addr %s373, 8
        %s375 = scalar_lea.vmem %s1, %s374
        %p376 = pneg %p76
        %p377 = pneg %p73
        %p378 = pneg %p97
        %p379 = pneg %p94
        %p380 = pneg %p118
        %p381 = pneg %p115
        %p382 = pneg %p139
        %p383 = pneg %p136
        %p384 = pneg %p160
        %p385 = pneg %p157
        %p386 = pneg %p181
        %p387 = pneg %p178
        %p388 = pneg %p202
        %p389 = pneg %p199
        %p390 = pneg %p223
        %p391 = pneg %p220
        %p392 = pneg %p244
        %p393 = pneg %p241
        %p394 = pneg %p270
        %p395 = pneg %p267
        %s396 = sand.u32 %s257, 1
        %s397 = scalar_lea.sflag [#allocation3], %s396
        %s398 = sand.u32 %s257, 1
        %s399 = smul.addr %s398, 128
        %s400 = scalar_lea.vmem [#allocation2], %s399
        %p401 = pneg %p296
        %p402 = pneg %p293
        %s403 = sand.u32 %s283, 1
        %s404 = scalar_lea.sflag [#allocation5], %s403
        %s405 = sand.u32 %s283, 1
        %s406 = smul.addr %s405, 128
        %s407 = scalar_lea.vmem [#allocation4], %s406
        %s408 = smul.u32 16, %s29
        %p409 = scmp.lt.s32.totalorder %s408, 31
        %s410 = scalar_select %p409, %s408, 31
        %s411 = smul.addr %s410, 8
        %s412 = scalar_lea.vmem %s0, %s411
        %s413 = smul.u32 16, %s29
        %s414 = smul.u32 16, %s29
        %p415 = scmp.lt.s32.totalorder %s414, 31
        %s416 = scalar_select %p415, %s414, 31
        %s417 = smul.addr %s416, 8
        %s418 = scalar_lea.vmem %s1, %s417
        %s419 = smul.u32 16, %s29
        %s420 = smul.u32 16, %s29
        %s421 = smul.u32 16, %s29
        %v422 = vld [vmem:[%s412] sm:$0xff]
        %v423 = vld [vmem:[%s412 + $0x8] sm:$0xff]
        %v424 = vld [vmem:[%s412 + $0x10] sm:$0xff]
        %v425 = vld [vmem:[%s412 + $0x18] sm:$0xff]
        %v426 = vld [vmem:[%s412 + $0x20] sm:$0xff]
        %v427 = vld [vmem:[%s412 + $0x28] sm:$0xff]
        %v428 = vld [vmem:[%s412 + $0x30] sm:$0xff]
        %v429 = vld [vmem:[%s412 + $0x38] sm:$0xff]
        %v430 = vld [vmem:[%s412 + $0x40] sm:$0xff]
        %v431 = vld [vmem:[%s412 + $0x48] sm:$0xff]
        %v432 = vld [vmem:[%s412 + $0x50] sm:$0xff]
        %v433 = vld [vmem:[%s412 + $0x58] sm:$0xff]
        %v434 = vld [vmem:[%s412 + $0x60] sm:$0xff]
        %v435 = vld [vmem:[%s412 + $0x68] sm:$0xff]
        %v436 = vld [vmem:[%s412 + $0x70] sm:$0xff]
        %v437 = vld [vmem:[%s412 + $0x78] sm:$0xff]
        %v438 = vld [vmem:[%s2] sm:$0xff]
        %v439 = vld [vmem:[%s2 + $0x8] sm:$0xff]
        %v440 = vld [vmem:[%s2 + $0x10] sm:$0xff]
        %v441 = vld [vmem:[%s2 + $0x18] sm:$0xff]
        %v442 = vld [vmem:[%s2 + $0x20] sm:$0xff]
        %v443 = vld [vmem:[%s2 + $0x28] sm:$0xff]
        %v444 = vld [vmem:[%s2 + $0x30] sm:$0xff]
        %v445 = vld [vmem:[%s2 + $0x38] sm:$0xff]
        %v446 = vld [vmem:[%s3] sm:$0x1]
        %v448 = vlaneseq
        %v449 = vshrl.u32 %v448, 7
        %v450 = vsub.s32 0, %v449
        %v451 = vrot.slane %v446, %v450
        %vm453 = vcmask 523264
        %v455 = vsel %vm453, %v422, 0
        %v458 = vsel %vm453, %v423, 0
        %v461 = vsel %vm453, %v424, 0
        %v464 = vsel %vm453, %v425, 0
        %v467 = vsel %vm453, %v426, 0
        %v470 = vsel %vm453, %v427, 0
        %v473 = vsel %vm453, %v428, 0
        %v476 = vsel %vm453, %v429, 0
        %v479 = vsel %vm453, %v430, 0
        %v482 = vsel %vm453, %v431, 0
        %v485 = vsel %vm453, %v432, 0
        %v488 = vsel %vm453, %v433, 0
        %v491 = vsel %vm453, %v434, 0
        %v494 = vsel %vm453, %v435, 0
        %v497 = vsel %vm453, %v436, 0
        %v500 = vsel %vm453, %v437, 0
        %502 = vmatprep.subr.mxu0 0.0
        %503 = vmatpush1.msra.mxu0 %v438
        %504 = vmatprep.subr.mxu0 0.0
        %505 = vmatpush1.msra.mxu0 %v439
        %506 = vmatprep.subr.mxu0 0.0
        %507 = vmatpush1.msra.mxu0 %v440
        %508 = vmatprep.subr.mxu0 0.0
        %509 = vmatpush1.msra.mxu0 %v441
        %510 = vmatprep.subr.mxu0 0.0
        %511 = vmatpush1.msra.mxu0 %v442
        %512 = vmatprep.subr.mxu0 0.0
        %513 = vmatpush1.msra.mxu0 %v443
        %514 = vmatprep.subr.mxu0 0.0
        %515 = vmatpush1.msra.mxu0 %v444
        %516 = vmatprep.subr.mxu0 0.0
        %517 = vmatpush1.msra.mxu0 %v445
        %518 = vmatprep.subr.mxu0 0.0
        %519 = vmatpush1.msra.mxu0 0.0
        %520 = vmatprep.subr.mxu0 0.0
        %521 = vmatpush1.msra.mxu0 0.0
        %522 = vmatprep.subr.mxu0 0.0
        %523 = vmatpush1.msra.mxu0 0.0
        %524 = vmatprep.subr.mxu0 0.0
        %525 = vmatpush1.msra.mxu0 0.0
        %526 = vmatprep.subr.mxu0 0.0
        %527 = vmatpush1.msra.mxu0 0.0
        %528 = vmatprep.subr.mxu0 0.0
        %529 = vmatpush1.msra.mxu0 0.0
        %530 = vmatprep.subr.mxu0 0.0
        %531 = vmatpush1.msra.mxu0 0.0
        %532 = vmatprep.subr.mxu0 0.0
        %533 = vmatpush1.msra.mxu0 0.0
        %534 = vmatprep.subr.mxu0 0.0
        %535 = vmatpush1.msra.mxu0 0.0
        %536 = vmatprep.subr.mxu0 0.0
        %537 = vmatpush1.msra.mxu0 0.0
        %538 = vmatprep.subr.mxu0 0.0
        %539 = vmatpush1.msra.mxu0 0.0
        %540 = vmatprep.subr.mxu0 0.0
        %541 = vmatpush1.msra.mxu0 0.0
        %542 = vmatprep.subr.mxu0 0.0
        %543 = vmatpush1.msra.mxu0 0.0
        %544 = vmatprep.subr.mxu0 0.0
        %545 = vmatpush1.msra.mxu0 0.0
        %546 = vmatprep.subr.mxu0 0.0
        %547 = vmatpush1.msra.mxu0 0.0
        %548 = vmatprep.subr.mxu0 0.0
        %549 = vmatpush1.msra.mxu0 0.0
        %550 = vmatprep.subr.mxu0 0.0
        %551 = vmatpush1.msra.mxu0 0.0
        %552 = vmatprep.subr.mxu0 0.0
        %553 = vmatpush1.msra.mxu0 0.0
        %554 = vmatprep.subr.mxu0 0.0
        %555 = vmatpush1.msra.mxu0 0.0
        %556 = vmatprep.subr.mxu0 0.0
        %557 = vmatpush1.msra.mxu0 0.0
        %558 = vmatprep.subr.mxu0 0.0
        %559 = vmatpush1.msra.mxu0 0.0
        %560 = vmatprep.subr.mxu0 0.0
        %561 = vmatpush1.msra.mxu0 0.0
        %562 = vmatprep.subr.mxu0 0.0
        %563 = vmatpush1.msra.mxu0 0.0
        %564 = vmatprep.subr.mxu0 0.0
        %565 = vmatpush1.msra.mxu0 0.0
        %566 = vmatprep.mubr.f32.mxu0 0.0
        %567 = vmatmul.mubr.f32.gmra.mrb[0].mxu0 %v455
        %v568 = vpop.f32.mrb[0].mxu0
        %v569 = vadd.f32 %v451, %v568
        %v570 = vpop.f32.mrb[0].mxu0
        %571 = vmatprep.mubr.f32.mxu0 0.0
        %572 = vmatmul.mubr.f32.gmra.mrb[0].mxu0 %v458
        %v573 = vpop.f32.mrb[0].mxu0
        %v574 = vadd.f32 %v451, %v573
        %v575 = vpop.f32.mrb[0].mxu0
        %576 = vmatprep.mubr.f32.mxu0 0.0
        %577 = vmatmul.mubr.f32.gmra.mrb[0].mxu0 %v461
        %v578 = vpop.f32.mrb[0].mxu0
        %v579 = vadd.f32 %v451, %v578
        %v580 = vpop.f32.mrb[0].mxu0
        %581 = vmatprep.mubr.f32.mxu0 0.0
        %582 = vmatmul.mubr.f32.gmra.mrb[0].mxu0 %v464
        %v583 = vpop.f32.mrb[0].mxu0
        %v584 = vadd.f32 %v451, %v583
        %v585 = vpop.f32.mrb[0].mxu0
        %586 = vmatprep.mubr.f32.mxu0 0.0
        %587 = vmatmul.mubr.f32.gmra.mrb[0].mxu0 %v467
        %v588 = vpop.f32.mrb[0].mxu0
        %v589 = vadd.f32 %v451, %v588
        %v590 = vpop.f32.mrb[0].mxu0
        %591 = vmatprep.mubr.f32.mxu0 0.0
        %592 = vmatmul.mubr.f32.gmra.mrb[0].mxu0 %v470
        %v593 = vpop.f32.mrb[0].mxu0
        %v594 = vadd.f32 %v451, %v593
        %v595 = vpop.f32.mrb[0].mxu0
        %596 = vmatprep.mubr.f32.mxu0 0.0
        %597 = vmatmul.mubr.f32.gmra.mrb[0].mxu0 %v473
        %v598 = vpop.f32.mrb[0].mxu0
        %v599 = vadd.f32 %v451, %v598
        %v600 = vpop.f32.mrb[0].mxu0
        %601 = vmatprep.mubr.f32.mxu0 0.0
        %602 = vmatmul.mubr.f32.gmra.mrb[0].mxu0 %v476
        %v603 = vpop.f32.mrb[0].mxu0
        %v604 = vadd.f32 %v451, %v603
        %v605 = vpop.f32.mrb[0].mxu0
        %606 = vmatprep.mubr.f32.mxu0 0.0
        %607 = vmatmul.mubr.f32.gmra.mrb[0].mxu0 %v479
        %v608 = vpop.f32.mrb[0].mxu0
        %v609 = vadd.f32 %v451, %v608
        %v610 = vpop.f32.mrb[0].mxu0
        %611 = vmatprep.mubr.f32.mxu0 0.0
        %612 = vmatmul.mubr.f32.gmra.mrb[0].mxu0 %v482
        %v613 = vpop.f32.mrb[0].mxu0
        %v614 = vadd.f32 %v451, %v613
        %v615 = vpop.f32.mrb[0].mxu0
        %616 = vmatprep.mubr.f32.mxu0 0.0
        %617 = vmatmul.mubr.f32.gmra.mrb[0].mxu0 %v485
        %v618 = vpop.f32.mrb[0].mxu0
        %v619 = vadd.f32 %v451, %v618
        %v620 = vpop.f32.mrb[0].mxu0
        %621 = vmatprep.mubr.f32.mxu0 0.0
        %622 = vmatmul.mubr.f32.gmra.mrb[0].mxu0 %v488
        %v623 = vpop.f32.mrb[0].mxu0
        %v624 = vadd.f32 %v451, %v623
        %v625 = vpop.f32.mrb[0].mxu0
        %626 = vmatprep.mubr.f32.mxu0 0.0
        %627 = vmatmul.mubr.f32.gmra.mrb[0].mxu0 %v491
        %v628 = vpop.f32.mrb[0].mxu0
        %v629 = vadd.f32 %v451, %v628
        %v630 = vpop.f32.mrb[0].mxu0
        %631 = vmatprep.mubr.f32.mxu0 0.0
        %632 = vmatmul.mubr.f32.gmra.mrb[0].mxu0 %v494
        %v633 = vpop.f32.mrb[0].mxu0
        %v634 = vadd.f32 %v451, %v633
        %v635 = vpop.f32.mrb[0].mxu0
        %636 = vmatprep.mubr.f32.mxu0 0.0
        %637 = vmatmul.mubr.f32.gmra.mrb[0].mxu0 %v497
        %v638 = vpop.f32.mrb[0].mxu0
        %v639 = vadd.f32 %v451, %v638
        %v640 = vpop.f32.mrb[0].mxu0
        %641 = vmatprep.mubr.f32.mxu0 0.0
        %642 = vmatmul.mubr.f32.gmra.mrb[0].mxu0 %v500
        %v643 = vpop.f32.mrb[0].mxu0
        %v644 = vadd.f32 %v451, %v643
        %v645 = vpop.f32.mrb[0].mxu0
        %646 = vdwg.mxu0
        %v647 = vmax.f32 %v569, 0.0
        %v648 = vmax.f32 %v574, 0.0
        %v649 = vmax.f32 %v579, 0.0
        %v650 = vmax.f32 %v584, 0.0
        %v651 = vmax.f32 %v589, 0.0
        %v652 = vmax.f32 %v594, 0.0
        %v653 = vmax.f32 %v599, 0.0
        %v654 = vmax.f32 %v604, 0.0
        %v655 = vmax.f32 %v609, 0.0
        %v656 = vmax.f32 %v614, 0.0
        %v657 = vmax.f32 %v619, 0.0
        %v658 = vmax.f32 %v624, 0.0
        %v659 = vmax.f32 %v629, 0.0
        %v660 = vmax.f32 %v634, 0.0
        %v661 = vmax.f32 %v639, 0.0
        %v662 = vmax.f32 %v644, 0.0
        %v663 = vld [vmem:[%s4] sm:$0xff]
        %v664 = vld [vmem:[%s4 + $0x8] sm:$0xff]
        %v665 = vld [vmem:[%s4 + $0x10] sm:$0xff]
        %v666 = vld [vmem:[%s4 + $0x18] sm:$0xff]
        %v667 = vld [vmem:[%s5] sm:$0x1]
        %v669 = vlaneseq
        %v670 = vshrl.u32 %v669, 7
        %v671 = vsub.s32 0, %v670
        %v672 = vrot.slane %v667, %v671
        %vm674 = vcmask 261120
        %v676 = vsel %vm674, %v647, 0
        %v679 = vsel %vm674, %v648, 0
        %v682 = vsel %vm674, %v649, 0
        %v685 = vsel %vm674, %v650, 0
        %v688 = vsel %vm674, %v651, 0
        %v691 = vsel %vm674, %v652, 0
        %v694 = vsel %vm674, %v653, 0
        %v697 = vsel %vm674, %v654, 0
        %v700 = vsel %vm674, %v655, 0
        %v703 = vsel %vm674, %v656, 0
        %v706 = vsel %vm674, %v657, 0
        %v709 = vsel %vm674, %v658, 0
        %v712 = vsel %vm674, %v659, 0
        %v715 = vsel %vm674, %v660, 0
        %v718 = vsel %vm674, %v661, 0
        %v721 = vsel %vm674, %v662, 0
        %723 = vmatprep.subr.mxu0 0.0
        %724 = vmatpush1.msra.mxu0 %v663
        %725 = vmatprep.subr.mxu0 0.0
        %726 = vmatpush1.msra.mxu0 %v664
        %727 = vmatprep.subr.mxu0 0.0
        %728 = vmatpush1.msra.mxu0 %v665
        %729 = vmatprep.subr.mxu0 0.0
        %730 = vmatpush1.msra.mxu0 %v666
        %731 = vmatprep.subr.mxu0 0.0
        %732 = vmatpush1.msra.mxu0 0.0
        %733 = vmatprep.subr.mxu0 0.0
        %734 = vmatpush1.msra.mxu0 0.0
        %735 = vmatprep.subr.mxu0 0.0
        %736 = vmatpush1.msra.mxu0 0.0
        %737 = vmatprep.subr.mxu0 0.0
        %738 = vmatpush1.msra.mxu0 0.0
        %739 = vmatprep.subr.mxu0 0.0
        %740 = vmatpush1.msra.mxu0 0.0
        %741 = vmatprep.subr.mxu0 0.0
        %742 = vmatpush1.msra.mxu0 0.0
        %743 = vmatprep.subr.mxu0 0.0
        %744 = vmatpush1.msra.mxu0 0.0
        %745 = vmatprep.subr.mxu0 0.0
        %746 = vmatpush1.msra.mxu0 0.0
        %747 = vmatprep.subr.mxu0 0.0
        %748 = vmatpush1.msra.mxu0 0.0
        %749 = vmatprep.subr.mxu0 0.0
        %750 = vmatpush1.msra.mxu0 0.0
        %751 = vmatprep.subr.mxu0 0.0
        %752 = vmatpush1.msra.mxu0 0.0
        %753 = vmatprep.subr.mxu0 0.0
        %754 = vmatpush1.msra.mxu0 0.0
        %755 = vmatprep.subr.mxu0 0.0
        %756 = vmatpush1.msra.mxu0 0.0
        %757 = vmatprep.subr.mxu0 0.0
        %758 = vmatpush1.msra.mxu0 0.0
        %759 = vmatprep.subr.mxu0 0.0
        %760 = vmatpush1.msra.mxu0 0.0
        %761 = vmatprep.subr.mxu0 0.0
        %762 = vmatpush1.msra.mxu0 0.0
        %763 = vmatprep.subr.mxu0 0.0
        %764 = vmatpush1.msra.mxu0 0.0
        %765 = vmatprep.subr.mxu0 0.0
        %766 = vmatpush1.msra.mxu0 0.0
        %767 = vmatprep.subr.mxu0 0.0
        %768 = vmatpush1.msra.mxu0 0.0
        %769 = vmatprep.subr.mxu0 0.0
        %770 = vmatpush1.msra.mxu0 0.0
        %771 = vmatprep.subr.mxu0 0.0
        %772 = vmatpush1.msra.mxu0 0.0
        %773 = vmatprep.subr.mxu0 0.0
        %774 = vmatpush1.msra.mxu0 0.0
        %775 = vmatprep.subr.mxu0 0.0
        %776 = vmatpush1.msra.mxu0 0.0
        %777 = vmatprep.subr.mxu0 0.0
        %778 = vmatpush1.msra.mxu0 0.0
        %779 = vmatprep.subr.mxu0 0.0
        %780 = vmatpush1.msra.mxu0 0.0
        %781 = vmatprep.subr.mxu0 0.0
        %782 = vmatpush1.msra.mxu0 0.0
        %783 = vmatprep.subr.mxu0 0.0
        %784 = vmatpush1.msra.mxu0 0.0
        %785 = vmatprep.subr.mxu0 0.0
        %786 = vmatpush1.msra.mxu0 0.0
        %787 = vmatprep.mubr.f32.mxu0 0.0
        %788 = vmatmul.mubr.f32.gmra.mrb[0].mxu0 %v676
        %v789 = vpop.f32.mrb[0].mxu0
        %v790 = vadd.f32 %v672, %v789
        %v791 = vpop.f32.mrb[0].mxu0
        %792 = vmatprep.mubr.f32.mxu0 0.0
        %793 = vmatmul.mubr.f32.gmra.mrb[0].mxu0 %v679
        %v794 = vpop.f32.mrb[0].mxu0
        %v795 = vadd.f32 %v672, %v794
        %v796 = vpop.f32.mrb[0].mxu0
        %797 = vmatprep.mubr.f32.mxu0 0.0
        %798 = vmatmul.mubr.f32.gmra.mrb[0].mxu0 %v682
        %v799 = vpop.f32.mrb[0].mxu0
        %v800 = vadd.f32 %v672, %v799
        %v801 = vpop.f32.mrb[0].mxu0
        %802 = vmatprep.mubr.f32.mxu0 0.0
        %803 = vmatmul.mubr.f32.gmra.mrb[0].mxu0 %v685
        %v804 = vpop.f32.mrb[0].mxu0
        %v805 = vadd.f32 %v672, %v804
        %v806 = vpop.f32.mrb[0].mxu0
        %807 = vmatprep.mubr.f32.mxu0 0.0
        %808 = vmatmul.mubr.f32.gmra.mrb[0].mxu0 %v688
        %v809 = vpop.f32.mrb[0].mxu0
        %v810 = vadd.f32 %v672, %v809
        %v811 = vpop.f32.mrb[0].mxu0
        %812 = vmatprep.mubr.f32.mxu0 0.0
        %813 = vmatmul.mubr.f32.gmra.mrb[0].mxu0 %v691
        %v814 = vpop.f32.mrb[0].mxu0
        %v815 = vadd.f32 %v672, %v814
        %v816 = vpop.f32.mrb[0].mxu0
        %817 = vmatprep.mubr.f32.mxu0 0.0
        %818 = vmatmul.mubr.f32.gmra.mrb[0].mxu0 %v694
        %v819 = vpop.f32.mrb[0].mxu0
        %v820 = vadd.f32 %v672, %v819
        %v821 = vpop.f32.mrb[0].mxu0
        %822 = vmatprep.mubr.f32.mxu0 0.0
        %823 = vmatmul.mubr.f32.gmra.mrb[0].mxu0 %v697
        %v824 = vpop.f32.mrb[0].mxu0
        %v825 = vadd.f32 %v672, %v824
        %v826 = vpop.f32.mrb[0].mxu0
        %827 = vmatprep.mubr.f32.mxu0 0.0
        %828 = vmatmul.mubr.f32.gmra.mrb[0].mxu0 %v700
        %v829 = vpop.f32.mrb[0].mxu0
        %v830 = vadd.f32 %v672, %v829
        %v831 = vpop.f32.mrb[0].mxu0
        %832 = vmatprep.mubr.f32.mxu0 0.0
        %833 = vmatmul.mubr.f32.gmra.mrb[0].mxu0 %v703
        %v834 = vpop.f32.mrb[0].mxu0
        %v835 = vadd.f32 %v672, %v834
        %v836 = vpop.f32.mrb[0].mxu0
        %837 = vmatprep.mubr.f32.mxu0 0.0
        %838 = vmatmul.mubr.f32.gmra.mrb[0].mxu0 %v706
        %v839 = vpop.f32.mrb[0].mxu0
        %v840 = vadd.f32 %v672, %v839
        %v841 = vpop.f32.mrb[0].mxu0
        %842 = vmatprep.mubr.f32.mxu0 0.0
        %843 = vmatmul.mubr.f32.gmra.mrb[0].mxu0 %v709
        %v844 = vpop.f32.mrb[0].mxu0
        %v845 = vadd.f32 %v672, %v844
        %v846 = vpop.f32.mrb[0].mxu0
        %847 = vmatprep.mubr.f32.mxu0 0.0
        %848 = vmatmul.mubr.f32.gmra.mrb[0].mxu0 %v712
        %v849 = vpop.f32.mrb[0].mxu0
        %v850 = vadd.f32 %v672, %v849
        %v851 = vpop.f32.mrb[0].mxu0
        %852 = vmatprep.mubr.f32.mxu0 0.0
        %853 = vmatmul.mubr.f32.gmra.mrb[0].mxu0 %v715
        %v854 = vpop.f32.mrb[0].mxu0
        %v855 = vadd.f32 %v672, %v854
        %v856 = vpop.f32.mrb[0].mxu0
        %857 = vmatprep.mubr.f32.mxu0 0.0
        %858 = vmatmul.mubr.f32.gmra.mrb[0].mxu0 %v718
        %v859 = vpop.f32.mrb[0].mxu0
        %v860 = vadd.f32 %v672, %v859
        %v861 = vpop.f32.mrb[0].mxu0
        %862 = vmatprep.mubr.f32.mxu0 0.0
        %863 = vmatmul.mubr.f32.gmra.mrb[0].mxu0 %v721
        %v864 = vpop.f32.mrb[0].mxu0
        %v865 = vadd.f32 %v672, %v864
        %v866 = vpop.f32.mrb[0].mxu0
        %867 = vdwg.mxu0
        %v868 = vld [vmem:[%s418] sm:$0xff]
        %v869 = vld [vmem:[%s418 + $0x8] sm:$0xff]
        %v870 = vld [vmem:[%s418 + $0x10] sm:$0xff]
        %v871 = vld [vmem:[%s418 + $0x18] sm:$0xff]
        %v872 = vld [vmem:[%s418 + $0x20] sm:$0xff]
        %v873 = vld [vmem:[%s418 + $0x28] sm:$0xff]
        %v874 = vld [vmem:[%s418 + $0x30] sm:$0xff]
        %v875 = vld [vmem:[%s418 + $0x38] sm:$0xff]
        %v876 = vld [vmem:[%s418 + $0x40] sm:$0xff]
        %v877 = vld [vmem:[%s418 + $0x48] sm:$0xff]
        %v878 = vld [vmem:[%s418 + $0x50] sm:$0xff]
        %v879 = vld [vmem:[%s418 + $0x58] sm:$0xff]
        %v880 = vld [vmem:[%s418 + $0x60] sm:$0xff]
        %v881 = vld [vmem:[%s418 + $0x68] sm:$0xff]
        %v882 = vld [vmem:[%s418 + $0x70] sm:$0xff]
        %v883 = vld [vmem:[%s418 + $0x78] sm:$0xff]
        %v884 = vmul.f32 %v790, 0.5
        %v885 = vmul.f32 %v795, 0.5
        %v886 = vmul.f32 %v800, 0.5
        %v887 = vmul.f32 %v805, 0.5
        %v888 = vmul.f32 %v810, 0.5
        %v889 = vmul.f32 %v815, 0.5
        %v890 = vmul.f32 %v820, 0.5
        %v891 = vmul.f32 %v825, 0.5
        %v892 = vmul.f32 %v830, 0.5
        %v893 = vmul.f32 %v835, 0.5
        %v894 = vmul.f32 %v840, 0.5
        %v895 = vmul.f32 %v845, 0.5
        %v896 = vmul.f32 %v850, 0.5
        %v897 = vmul.f32 %v855, 0.5
        %v898 = vmul.f32 %v860, 0.5
        %v899 = vmul.f32 %v865, 0.5
        %v900 = vmul.f32 %v884, 1.442695
        %v901 = vpow.pop %v900
        %v902 = vmul.f32 %v885, 1.442695
        %v903 = vpow.pop %v902
        %v904 = vmul.f32 %v886, 1.442695
        %v905 = vpow.pop %v904
        %v906 = vmul.f32 %v887, 1.442695
        %v907 = vpow.pop %v906
        %v908 = vmul.f32 %v888, 1.442695
        %v909 = vpow.pop %v908
        %v910 = vmul.f32 %v889, 1.442695
        %v911 = vpow.pop %v910
        %v912 = vmul.f32 %v890, 1.442695
        %v913 = vpow.pop %v912
        %v914 = vmul.f32 %v891, 1.442695
        %v915 = vpow.pop %v914
        %v916 = vmul.f32 %v892, 1.442695
        %v917 = vpow.pop %v916
        %v918 = vmul.f32 %v893, 1.442695
        %v919 = vpow.pop %v918
        %v920 = vmul.f32 %v894, 1.442695
        %v921 = vpow.pop %v920
        %v922 = vmul.f32 %v895, 1.442695
        %v923 = vpow.pop %v922
        %v924 = vmul.f32 %v896, 1.442695
        %v925 = vpow.pop %v924
        %v926 = vmul.f32 %v897, 1.442695
        %v927 = vpow.pop %v926
        %v928 = vmul.f32 %v898, 1.442695
        %v929 = vpow.pop %v928
        %v930 = vmul.f32 %v899, 1.442695
        %v931 = vpow.pop %v930
        %948 = vrot.lane.b32.xlu0 %v901, 112
        %v949 = vpop.permute.xlu0 %948
        %950 = vrot.lane.b32.xlu0 %v903, 112
        %v951 = vpop.permute.xlu0 %950
        %952 = vrot.lane.b32.xlu0 %v905, 112
        %v953 = vpop.permute.xlu0 %952
        %954 = vrot.lane.b32.xlu0 %v907, 112
        %v955 = vpop.permute.xlu0 %954
        %956 = vrot.lane.b32.xlu0 %v909, 112
        %v957 = vpop.permute.xlu0 %956
        %958 = vrot.lane.b32.xlu0 %v911, 112
        %v959 = vpop.permute.xlu0 %958
        %960 = vrot.lane.b32.xlu0 %v913, 112
        %v961 = vpop.permute.xlu0 %960
        %962 = vrot.lane.b32.xlu0 %v915, 112
        %v963 = vpop.permute.xlu0 %962
        %964 = vrot.lane.b32.xlu0 %v917, 112
        %v965 = vpop.permute.xlu0 %964
        %966 = vrot.lane.b32.xlu0 %v919, 112
        %v967 = vpop.permute.xlu0 %966
        %968 = vrot.lane.b32.xlu0 %v921, 112
        %v969 = vpop.permute.xlu0 %968
        %970 = vrot.lane.b32.xlu0 %v923, 112
        %v971 = vpop.permute.xlu0 %970
        %972 = vrot.lane.b32.xlu0 %v925, 112
        %v973 = vpop.permute.xlu0 %972
        %974 = vrot.lane.b32.xlu0 %v927, 112
        %v975 = vpop.permute.xlu0 %974
        %976 = vrot.lane.b32.xlu0 %v929, 112
        %v977 = vpop.permute.xlu0 %976
        %978 = vrot.lane.b32.xlu0 %v931, 112
        %v979 = vpop.permute.xlu0 %978
        %v996 = vmul.f32 %v868, %v949
        %v997 = vmul.f32 %v869, %v951
        %v998 = vmul.f32 %v870, %v953
        %v999 = vmul.f32 %v871, %v955
        %v1000 = vmul.f32 %v872, %v957
        %v1001 = vmul.f32 %v873, %v959
        %v1002 = vmul.f32 %v874, %v961
        %v1003 = vmul.f32 %v875, %v963
        %v1004 = vmul.f32 %v876, %v965
        %v1005 = vmul.f32 %v877, %v967
        %v1006 = vmul.f32 %v878, %v969
        %v1007 = vmul.f32 %v879, %v971
        %v1008 = vmul.f32 %v880, %v973
        %v1009 = vmul.f32 %v881, %v975
        %v1010 = vmul.f32 %v882, %v977
        %v1011 = vmul.f32 %v883, %v979
        %v1012 = vadd.f32 %v790, %v996
        %v1013 = vadd.f32 %v795, %v997
        %v1014 = vadd.f32 %v800, %v998
        %v1015 = vadd.f32 %v805, %v999
        %v1016 = vadd.f32 %v810, %v1000
        %v1017 = vadd.f32 %v815, %v1001
        %v1018 = vadd.f32 %v820, %v1002
        %v1019 = vadd.f32 %v825, %v1003
        %v1020 = vadd.f32 %v830, %v1004
        %v1021 = vadd.f32 %v835, %v1005
        %v1022 = vadd.f32 %v840, %v1006
        %v1023 = vadd.f32 %v845, %v1007
        %v1024 = vadd.f32 %v850, %v1008
        %v1025 = vadd.f32 %v855, %v1009
        %v1026 = vadd.f32 %v860, %v1010
        %v1027 = vadd.f32 %v865, %v1011
        %v1028 = vld [vmem:[%s6] sm:$0xff]
        %v1029 = vld [vmem:[%s6 + $0x8] sm:$0xff]
        %v1030 = vld [vmem:[%s7] sm:$0x1]
        %v1032 = vlaneseq
        %v1033 = vshrl.u32 %v1032, 7
        %v1034 = vsub.s32 0, %v1033
        %v1035 = vrot.slane %v1030, %v1034
        %vm1037 = vcmask 130048
        %v1039 = vsel %vm1037, %v1012, 0
        %v1042 = vsel %vm1037, %v1013, 0
        %v1045 = vsel %vm1037, %v1014, 0
        %v1048 = vsel %vm1037, %v1015, 0
        %v1051 = vsel %vm1037, %v1016, 0
        %v1054 = vsel %vm1037, %v1017, 0
        %v1057 = vsel %vm1037, %v1018, 0
        %v1060 = vsel %vm1037, %v1019, 0
        %v1063 = vsel %vm1037, %v1020, 0
        %v1066 = vsel %vm1037, %v1021, 0
        %v1069 = vsel %vm1037, %v1022, 0
        %v1072 = vsel %vm1037, %v1023, 0
        %v1075 = vsel %vm1037, %v1024, 0
        %v1078 = vsel %vm1037, %v1025, 0
        %v1081 = vsel %vm1037, %v1026, 0
        %v1084 = vsel %vm1037, %v1027, 0
        %1086 = vmatprep.subr.mxu0 0.0
        %1087 = vmatpush1.msra.mxu0 %v1028
        %1088 = vmatprep.subr.mxu0 0.0
        %1089 = vmatpush1.msra.mxu0 %v1029
        %1090 = vmatprep.subr.mxu0 0.0
        %1091 = vmatpush1.msra.mxu0 0.0
        %1092 = vmatprep.subr.mxu0 0.0
        %1093 = vmatpush1.msra.mxu0 0.0
        %1094 = vmatprep.subr.mxu0 0.0
        %1095 = vmatpush1.msra.mxu0 0.0
        %1096 = vmatprep.subr.mxu0 0.0
        %1097 = vmatpush1.msra.mxu0 0.0
        %1098 = vmatprep.subr.mxu0 0.0
        %1099 = vmatpush1.msra.mxu0 0.0
        %1100 = vmatprep.subr.mxu0 0.0
        %1101 = vmatpush1.msra.mxu0 0.0
        %1102 = vmatprep.subr.mxu0 0.0
        %1103 = vmatpush1.msra.mxu0 0.0
        %1104 = vmatprep.subr.mxu0 0.0
        %1105 = vmatpush1.msra.mxu0 0.0
        %1106 = vmatprep.subr.mxu0 0.0
        %1107 = vmatpush1.msra.mxu0 0.0
        %1108 = vmatprep.subr.mxu0 0.0
        %1109 = vmatpush1.msra.mxu0 0.0
        %1110 = vmatprep.subr.mxu0 0.0
        %1111 = vmatpush1.msra.mxu0 0.0
        %1112 = vmatprep.subr.mxu0 0.0
        %1113 = vmatpush1.msra.mxu0 0.0
        %1114 = vmatprep.subr.mxu0 0.0
        %1115 = vmatpush1.msra.mxu0 0.0
        %1116 = vmatprep.subr.mxu0 0.0
        %1117 = vmatpush1.msra.mxu0 0.0
        %1118 = vmatprep.subr.mxu0 0.0
        %1119 = vmatpush1.msra.mxu0 0.0
        %1120 = vmatprep.subr.mxu0 0.0
        %1121 = vmatpush1.msra.mxu0 0.0
        %1122 = vmatprep.subr.mxu0 0.0
        %1123 = vmatpush1.msra.mxu0 0.0
        %1124 = vmatprep.subr.mxu0 0.0
        %1125 = vmatpush1.msra.mxu0 0.0
        %1126 = vmatprep.subr.mxu0 0.0
        %1127 = vmatpush1.msra.mxu0 0.0
        %1128 = vmatprep.subr.mxu0 0.0
        %1129 = vmatpush1.msra.mxu0 0.0
        %1130 = vmatprep.subr.mxu0 0.0
        %1131 = vmatpush1.msra.mxu0 0.0
        %1132 = vmatprep.subr.mxu0 0.0
        %1133 = vmatpush1.msra.mxu0 0.0
        %1134 = vmatprep.subr.mxu0 0.0
        %1135 = vmatpush1.msra.mxu0 0.0
        %1136 = vmatprep.subr.mxu0 0.0
        %1137 = vmatpush1.msra.mxu0 0.0
        %1138 = vmatprep.subr.mxu0 0.0
        %1139 = vmatpush1.msra.mxu0 0.0
        %1140 = vmatprep.subr.mxu0 0.0
        %1141 = vmatpush1.msra.mxu0 0.0
        %1142 = vmatprep.subr.mxu0 0.0
        %1143 = vmatpush1.msra.mxu0 0.0
        %1144 = vmatprep.subr.mxu0 0.0
        %1145 = vmatpush1.msra.mxu0 0.0
        %1146 = vmatprep.subr.mxu0 0.0
        %1147 = vmatpush1.msra.mxu0 0.0
        %1148 = vmatprep.subr.mxu0 0.0
        %1149 = vmatpush1.msra.mxu0 0.0
        %1150 = vmatprep.mubr.f32.mxu0 0.0
        %1151 = vmatmul.mubr.f32.gmra.mrb[0].mxu0 %v1039
        %v1152 = vpop.f32.mrb[0].mxu0
        %v1153 = vadd.f32 %v1035, %v1152
        %v1154 = vpop.f32.mrb[0].mxu0
        %1155 = vmatprep.mubr.f32.mxu0 0.0
        %1156 = vmatmul.mubr.f32.gmra.mrb[0].mxu0 %v1042
        %v1157 = vpop.f32.mrb[0].mxu0
        %v1158 = vadd.f32 %v1035, %v1157
        %v1159 = vpop.f32.mrb[0].mxu0
        %1160 = vmatprep.mubr.f32.mxu0 0.0
        %1161 = vmatmul.mubr.f32.gmra.mrb[0].mxu0 %v1045
        %v1162 = vpop.f32.mrb[0].mxu0
        %v1163 = vadd.f32 %v1035, %v1162
        %v1164 = vpop.f32.mrb[0].mxu0
        %1165 = vmatprep.mubr.f32.mxu0 0.0
        %1166 = vmatmul.mubr.f32.gmra.mrb[0].mxu0 %v1048
        %v1167 = vpop.f32.mrb[0].mxu0
        %v1168 = vadd.f32 %v1035, %v1167
        %v1169 = vpop.f32.mrb[0].mxu0
        %1170 = vmatprep.mubr.f32.mxu0 0.0
        %1171 = vmatmul.mubr.f32.gmra.mrb[0].mxu0 %v1051
        %v1172 = vpop.f32.mrb[0].mxu0
        %v1173 = vadd.f32 %v1035, %v1172
        %v1174 = vpop.f32.mrb[0].mxu0
        %1175 = vmatprep.mubr.f32.mxu0 0.0
        %1176 = vmatmul.mubr.f32.gmra.mrb[0].mxu0 %v1054
        %v1177 = vpop.f32.mrb[0].mxu0
        %v1178 = vadd.f32 %v1035, %v1177
        %v1179 = vpop.f32.mrb[0].mxu0
        %1180 = vmatprep.mubr.f32.mxu0 0.0
        %1181 = vmatmul.mubr.f32.gmra.mrb[0].mxu0 %v1057
        %v1182 = vpop.f32.mrb[0].mxu0
        %v1183 = vadd.f32 %v1035, %v1182
        %v1184 = vpop.f32.mrb[0].mxu0
        %1185 = vmatprep.mubr.f32.mxu0 0.0
        %1186 = vmatmul.mubr.f32.gmra.mrb[0].mxu0 %v1060
        %v1187 = vpop.f32.mrb[0].mxu0
        %v1188 = vadd.f32 %v1035, %v1187
        %v1189 = vpop.f32.mrb[0].mxu0
        %1190 = vmatprep.mubr.f32.mxu0 0.0
        %1191 = vmatmul.mubr.f32.gmra.mrb[0].mxu0 %v1063
        %v1192 = vpop.f32.mrb[0].mxu0
        %v1193 = vadd.f32 %v1035, %v1192
        %v1194 = vpop.f32.mrb[0].mxu0
        %1195 = vmatprep.mubr.f32.mxu0 0.0
        %1196 = vmatmul.mubr.f32.gmra.mrb[0].mxu0 %v1066
        %v1197 = vpop.f32.mrb[0].mxu0
        %v1198 = vadd.f32 %v1035, %v1197
        %v1199 = vpop.f32.mrb[0].mxu0
        %1200 = vmatprep.mubr.f32.mxu0 0.0
        %1201 = vmatmul.mubr.f32.gmra.mrb[0].mxu0 %v1069
        %v1202 = vpop.f32.mrb[0].mxu0
        %v1203 = vadd.f32 %v1035, %v1202
        %v1204 = vpop.f32.mrb[0].mxu0
        %1205 = vmatprep.mubr.f32.mxu0 0.0
        %1206 = vmatmul.mubr.f32.gmra.mrb[0].mxu0 %v1072
        %v1207 = vpop.f32.mrb[0].mxu0
        %v1208 = vadd.f32 %v1035, %v1207
        %v1209 = vpop.f32.mrb[0].mxu0
        %1210 = vmatprep.mubr.f32.mxu0 0.0
        %1211 = vmatmul.mubr.f32.gmra.mrb[0].mxu0 %v1075
        %v1212 = vpop.f32.mrb[0].mxu0
        %v1213 = vadd.f32 %v1035, %v1212
        %v1214 = vpop.f32.mrb[0].mxu0
        %1215 = vmatprep.mubr.f32.mxu0 0.0
        %1216 = vmatmul.mubr.f32.gmra.mrb[0].mxu0 %v1078
        %v1217 = vpop.f32.mrb[0].mxu0
        %v1218 = vadd.f32 %v1035, %v1217
        %v1219 = vpop.f32.mrb[0].mxu0
        %1220 = vmatprep.mubr.f32.mxu0 0.0
        %1221 = vmatmul.mubr.f32.gmra.mrb[0].mxu0 %v1081
        %v1222 = vpop.f32.mrb[0].mxu0
        %v1223 = vadd.f32 %v1035, %v1222
        %v1224 = vpop.f32.mrb[0].mxu0
        %1225 = vmatprep.mubr.f32.mxu0 0.0
        %1226 = vmatmul.mubr.f32.gmra.mrb[0].mxu0 %v1084
        %v1227 = vpop.f32.mrb[0].mxu0
        %v1228 = vadd.f32 %v1035, %v1227
        %v1229 = vpop.f32.mrb[0].mxu0
        %1230 = vdwg.mxu0
        %v1231 = vld [vmem:[%s8] sm:$0xff]
        %v1232 = vld [vmem:[%s8 + $0x8] sm:$0xff]
        %v1233 = vld [vmem:[%s8 + $0x10] sm:$0xff]
        %v1234 = vld [vmem:[%s8 + $0x18] sm:$0xff]
        %v1235 = vld [vmem:[%s9] sm:$0x1]
        %v1237 = vlaneseq
        %v1238 = vshrl.u32 %v1237, 7
        %v1239 = vsub.s32 0, %v1238
        %v1240 = vrot.slane %v1235, %v1239
        %v1243 = vsel %vm674, %v1153, 0
        %v1246 = vsel %vm674, %v1158, 0
        %v1249 = vsel %vm674, %v1163, 0
        %v1252 = vsel %vm674, %v1168, 0
        %v1255 = vsel %vm674, %v1173, 0
        %v1258 = vsel %vm674, %v1178, 0
        %v1261 = vsel %vm674, %v1183, 0
        %v1264 = vsel %vm674, %v1188, 0
        %v1267 = vsel %vm674, %v1193, 0
        %v1270 = vsel %vm674, %v1198, 0
        %v1273 = vsel %vm674, %v1203, 0
        %v1276 = vsel %vm674, %v1208, 0
        %v1279 = vsel %vm674, %v1213, 0
        %v1282 = vsel %vm674, %v1218, 0
        %v1285 = vsel %vm674, %v1223, 0
        %v1288 = vsel %vm674, %v1228, 0
        %1290 = vmatprep.subr.mxu0 0.0
        %1291 = vmatpush1.msra.mxu0 %v1231
        %1292 = vmatprep.subr.mxu0 0.0
        %1293 = vmatpush1.msra.mxu0 %v1232
        %1294 = vmatprep.subr.mxu0 0.0
        %1295 = vmatpush1.msra.mxu0 %v1233
        %1296 = vmatprep.subr.mxu0 0.0
        %1297 = vmatpush1.msra.mxu0 %v1234
        %1298 = vmatprep.subr.mxu0 0.0
        %1299 = vmatpush1.msra.mxu0 0.0
        %1300 = vmatprep.subr.mxu0 0.0
        %1301 = vmatpush1.msra.mxu0 0.0
        %1302 = vmatprep.subr.mxu0 0.0
        %1303 = vmatpush1.msra.mxu0 0.0
        %1304 = vmatprep.subr.mxu0 0.0
        %1305 = vmatpush1.msra.mxu0 0.0
        %1306 = vmatprep.subr.mxu0 0.0
        %1307 = vmatpush1.msra.mxu0 0.0
        %1308 = vmatprep.subr.mxu0 0.0
        %1309 = vmatpush1.msra.mxu0 0.0
        %1310 = vmatprep.subr.mxu0 0.0
        %1311 = vmatpush1.msra.mxu0 0.0
        %1312 = vmatprep.subr.mxu0 0.0
        %1313 = vmatpush1.msra.mxu0 0.0
        %1314 = vmatprep.subr.mxu0 0.0
        %1315 = vmatpush1.msra.mxu0 0.0
        %1316 = vmatprep.subr.mxu0 0.0
        %1317 = vmatpush1.msra.mxu0 0.0
        %1318 = vmatprep.subr.mxu0 0.0
        %1319 = vmatpush1.msra.mxu0 0.0
        %1320 = vmatprep.subr.mxu0 0.0
        %1321 = vmatpush1.msra.mxu0 0.0
        %1322 = vmatprep.subr.mxu0 0.0
        %1323 = vmatpush1.msra.mxu0 0.0
        %1324 = vmatprep.subr.mxu0 0.0
        %1325 = vmatpush1.msra.mxu0 0.0
        %1326 = vmatprep.subr.mxu0 0.0
        %1327 = vmatpush1.msra.mxu0 0.0
        %1328 = vmatprep.subr.mxu0 0.0
        %1329 = vmatpush1.msra.mxu0 0.0
        %1330 = vmatprep.subr.mxu0 0.0
        %1331 = vmatpush1.msra.mxu0 0.0
        %1332 = vmatprep.subr.mxu0 0.0
        %1333 = vmatpush1.msra.mxu0 0.0
        %1334 = vmatprep.subr.mxu0 0.0
        %1335 = vmatpush1.msra.mxu0 0.0
        %1336 = vmatprep.subr.mxu0 0.0
        %1337 = vmatpush1.msra.mxu0 0.0
        %1338 = vmatprep.subr.mxu0 0.0
        %1339 = vmatpush1.msra.mxu0 0.0
        %1340 = vmatprep.subr.mxu0 0.0
        %1341 = vmatpush1.msra.mxu0 0.0
        %1342 = vmatprep.subr.mxu0 0.0
        %1343 = vmatpush1.msra.mxu0 0.0
        %1344 = vmatprep.subr.mxu0 0.0
        %1345 = vmatpush1.msra.mxu0 0.0
        %1346 = vmatprep.subr.mxu0 0.0
        %1347 = vmatpush1.msra.mxu0 0.0
        %1348 = vmatprep.subr.mxu0 0.0
        %1349 = vmatpush1.msra.mxu0 0.0
        %1350 = vmatprep.subr.mxu0 0.0
        %1351 = vmatpush1.msra.mxu0 0.0
        %1352 = vmatprep.subr.mxu0 0.0
        %1353 = vmatpush1.msra.mxu0 0.0
        %1354 = vmatprep.mubr.f32.mxu0 0.0
        %1355 = vmatmul.mubr.f32.gmra.mrb[0].mxu0 %v1243
        %v1356 = vpop.f32.mrb[0].mxu0
        %v1357 = vadd.f32 %v1240, %v1356
        %v1358 = vpop.f32.mrb[0].mxu0
        %1359 = vmatprep.mubr.f32.mxu0 0.0
        %1360 = vmatmul.mubr.f32.gmra.mrb[0].mxu0 %v1246
        %v1361 = vpop.f32.mrb[0].mxu0
        %v1362 = vadd.f32 %v1240, %v1361
        %v1363 = vpop.f32.mrb[0].mxu0
        %1364 = vmatprep.mubr.f32.mxu0 0.0
        %1365 = vmatmul.mubr.f32.gmra.mrb[0].mxu0 %v1249
        %v1366 = vpop.f32.mrb[0].mxu0
        %v1367 = vadd.f32 %v1240, %v1366
        %v1368 = vpop.f32.mrb[0].mxu0
        %1369 = vmatprep.mubr.f32.mxu0 0.0
        %1370 = vmatmul.mubr.f32.gmra.mrb[0].mxu0 %v1252
        %v1371 = vpop.f32.mrb[0].mxu0
        %v1372 = vadd.f32 %v1240, %v1371
        %v1373 = vpop.f32.mrb[0].mxu0
        %1374 = vmatprep.mubr.f32.mxu0 0.0
        %1375 = vmatmul.mubr.f32.gmra.mrb[0].mxu0 %v1255
        %v1376 = vpop.f32.mrb[0].mxu0
        %v1377 = vadd.f32 %v1240, %v1376
        %v1378 = vpop.f32.mrb[0].mxu0
        %1379 = vmatprep.mubr.f32.mxu0 0.0
        %1380 = vmatmul.mubr.f32.gmra.mrb[0].mxu0 %v1258
        %v1381 = vpop.f32.mrb[0].mxu0
        %v1382 = vadd.f32 %v1240, %v1381
        %v1383 = vpop.f32.mrb[0].mxu0
        %1384 = vmatprep.mubr.f32.mxu0 0.0
        %1385 = vmatmul.mubr.f32.gmra.mrb[0].mxu0 %v1261
        %v1386 = vpop.f32.mrb[0].mxu0
        %v1387 = vadd.f32 %v1240, %v1386
        %v1388 = vpop.f32.mrb[0].mxu0
        %1389 = vmatprep.mubr.f32.mxu0 0.0
        %1390 = vmatmul.mubr.f32.gmra.mrb[0].mxu0 %v1264
        %v1391 = vpop.f32.mrb[0].mxu0
        %v1392 = vadd.f32 %v1240, %v1391
        %v1393 = vpop.f32.mrb[0].mxu0
        %1394 = vmatprep.mubr.f32.mxu0 0.0
        %1395 = vmatmul.mubr.f32.gmra.mrb[0].mxu0 %v1267
        %v1396 = vpop.f32.mrb[0].mxu0
        %v1397 = vadd.f32 %v1240, %v1396
        %v1398 = vpop.f32.mrb[0].mxu0
        %1399 = vmatprep.mubr.f32.mxu0 0.0
        %1400 = vmatmul.mubr.f32.gmra.mrb[0].mxu0 %v1270
        %v1401 = vpop.f32.mrb[0].mxu0
        %v1402 = vadd.f32 %v1240, %v1401
        %v1403 = vpop.f32.mrb[0].mxu0
        %1404 = vmatprep.mubr.f32.mxu0 0.0
        %1405 = vmatmul.mubr.f32.gmra.mrb[0].mxu0 %v1273
        %v1406 = vpop.f32.mrb[0].mxu0
        %v1407 = vadd.f32 %v1240, %v1406
        %v1408 = vpop.f32.mrb[0].mxu0
        %1409 = vmatprep.mubr.f32.mxu0 0.0
        %1410 = vmatmul.mubr.f32.gmra.mrb[0].mxu0 %v1276
        %v1411 = vpop.f32.mrb[0].mxu0
        %v1412 = vadd.f32 %v1240, %v1411
        %v1413 = vpop.f32.mrb[0].mxu0
        %1414 = vmatprep.mubr.f32.mxu0 0.0
        %1415 = vmatmul.mubr.f32.gmra.mrb[0].mxu0 %v1279
        %v1416 = vpop.f32.mrb[0].mxu0
        %v1417 = vadd.f32 %v1240, %v1416
        %v1418 = vpop.f32.mrb[0].mxu0
        %1419 = vmatprep.mubr.f32.mxu0 0.0
        %1420 = vmatmul.mubr.f32.gmra.mrb[0].mxu0 %v1282
        %v1421 = vpop.f32.mrb[0].mxu0
        %v1422 = vadd.f32 %v1240, %v1421
        %v1423 = vpop.f32.mrb[0].mxu0
        %1424 = vmatprep.mubr.f32.mxu0 0.0
        %1425 = vmatmul.mubr.f32.gmra.mrb[0].mxu0 %v1285
        %v1426 = vpop.f32.mrb[0].mxu0
        %v1427 = vadd.f32 %v1240, %v1426
        %v1428 = vpop.f32.mrb[0].mxu0
        %1429 = vmatprep.mubr.f32.mxu0 0.0
        %1430 = vmatmul.mubr.f32.gmra.mrb[0].mxu0 %v1288
        %v1431 = vpop.f32.mrb[0].mxu0
        %v1432 = vadd.f32 %v1240, %v1431
        %v1433 = vpop.f32.mrb[0].mxu0
        %1434 = vdwg.mxu0
        %v1435 = vsub.f32 0.0, %v1357
        %v1436 = vsub.f32 0.0, %v1362
        %v1437 = vsub.f32 0.0, %v1367
        %v1438 = vsub.f32 0.0, %v1372
        %v1439 = vsub.f32 0.0, %v1377
        %v1440 = vsub.f32 0.0, %v1382
        %v1441 = vsub.f32 0.0, %v1387
        %v1442 = vsub.f32 0.0, %v1392
        %v1443 = vsub.f32 0.0, %v1397
        %v1444 = vsub.f32 0.0, %v1402
        %v1445 = vsub.f32 0.0, %v1407
        %v1446 = vsub.f32 0.0, %v1412
        %v1447 = vsub.f32 0.0, %v1417
        %v1448 = vsub.f32 0.0, %v1422
        %v1449 = vsub.f32 0.0, %v1427
        %v1450 = vsub.f32 0.0, %v1432
        %v1451 = vmul.f32 %v1435, 1.442695
        %v1452 = vpow.pop %v1451
        %v1453 = vmul.f32 %v1436, 1.442695
        %v1454 = vpow.pop %v1453
        %v1455 = vmul.f32 %v1437, 1.442695
        %v1456 = vpow.pop %v1455
        %v1457 = vmul.f32 %v1438, 1.442695
        %v1458 = vpow.pop %v1457
        %v1459 = vmul.f32 %v1439, 1.442695
        %v1460 = vpow.pop %v1459
        %v1461 = vmul.f32 %v1440, 1.442695
        %v1462 = vpow.pop %v1461
        %v1463 = vmul.f32 %v1441, 1.442695
        %v1464 = vpow.pop %v1463
        %v1465 = vmul.f32 %v1442, 1.442695
        %v1466 = vpow.pop %v1465
        %v1467 = vmul.f32 %v1443, 1.442695
        %v1468 = vpow.pop %v1467
        %v1469 = vmul.f32 %v1444, 1.442695
        %v1470 = vpow.pop %v1469
        %v1471 = vmul.f32 %v1445, 1.442695
        %v1472 = vpow.pop %v1471
        %v1473 = vmul.f32 %v1446, 1.442695
        %v1474 = vpow.pop %v1473
        %v1475 = vmul.f32 %v1447, 1.442695
        %v1476 = vpow.pop %v1475
        %v1477 = vmul.f32 %v1448, 1.442695
        %v1478 = vpow.pop %v1477
        %v1479 = vmul.f32 %v1449, 1.442695
        %v1480 = vpow.pop %v1479
        %v1481 = vmul.f32 %v1450, 1.442695
        %v1482 = vpow.pop %v1481
        %v1483 = vadd.f32 %v1452, 1.0
        %v1484 = vadd.f32 %v1454, 1.0
        %v1485 = vadd.f32 %v1456, 1.0
        %v1486 = vadd.f32 %v1458, 1.0
        %v1487 = vadd.f32 %v1460, 1.0
        %v1488 = vadd.f32 %v1462, 1.0
        %v1489 = vadd.f32 %v1464, 1.0
        %v1490 = vadd.f32 %v1466, 1.0
        %v1491 = vadd.f32 %v1468, 1.0
        %v1492 = vadd.f32 %v1470, 1.0
        %v1493 = vadd.f32 %v1472, 1.0
        %v1494 = vadd.f32 %v1474, 1.0
        %v1495 = vadd.f32 %v1476, 1.0
        %v1496 = vadd.f32 %v1478, 1.0
        %v1497 = vadd.f32 %v1480, 1.0
        %v1498 = vadd.f32 %v1482, 1.0
        %v1499 = vrcp.pop %v1483
        %v1500 = vrcp.pop %v1484
        %v1501 = vrcp.pop %v1485
        %v1502 = vrcp.pop %v1486
        %v1503 = vrcp.pop %v1487
        %v1504 = vrcp.pop %v1488
        %v1505 = vrcp.pop %v1489
        %v1506 = vrcp.pop %v1490
        %v1507 = vrcp.pop %v1491
        %v1508 = vrcp.pop %v1492
        %v1509 = vrcp.pop %v1493
        %v1510 = vrcp.pop %v1494
        %v1511 = vrcp.pop %v1495
        %v1512 = vrcp.pop %v1496
        %v1513 = vrcp.pop %v1497
        %v1514 = vrcp.pop %v1498
        %1515 = vst [vmem:[%s400] sm:$0xff] %v1499
        %1516 = vst [vmem:[%s400 + $0x8] sm:$0xff] %v1500
        %1517 = vst [vmem:[%s400 + $0x10] sm:$0xff] %v1501
        %1518 = vst [vmem:[%s400 + $0x18] sm:$0xff] %v1502
        %1519 = vst [vmem:[%s400 + $0x20] sm:$0xff] %v1503
        %1520 = vst [vmem:[%s400 + $0x28] sm:$0xff] %v1504
        %1521 = vst [vmem:[%s400 + $0x30] sm:$0xff] %v1505
        %1522 = vst [vmem:[%s400 + $0x38] sm:$0xff] %v1506
        %1523 = vst [vmem:[%s400 + $0x40] sm:$0xff] %v1507
        %1524 = vst [vmem:[%s400 + $0x48] sm:$0xff] %v1508
        %1525 = vst [vmem:[%s400 + $0x50] sm:$0xff] %v1509
        %1526 = vst [vmem:[%s400 + $0x58] sm:$0xff] %v1510
        %1527 = vst [vmem:[%s400 + $0x60] sm:$0xff] %v1511
        %1528 = vst [vmem:[%s400 + $0x68] sm:$0xff] %v1512
        %1529 = vst [vmem:[%s400 + $0x70] sm:$0xff] %v1513
        %1530 = vst [vmem:[%s400 + $0x78] sm:$0xff] %v1514
        %1531 = vst [vmem:[%s407] sm:$0xff] %v790
        %1532 = vst [vmem:[%s407 + $0x8] sm:$0xff] %v795
        %1533 = vst [vmem:[%s407 + $0x10] sm:$0xff] %v800
        %1534 = vst [vmem:[%s407 + $0x18] sm:$0xff] %v805
        %1535 = vst [vmem:[%s407 + $0x20] sm:$0xff] %v810
        %1536 = vst [vmem:[%s407 + $0x28] sm:$0xff] %v815
        %1537 = vst [vmem:[%s407 + $0x30] sm:$0xff] %v820
        %1538 = vst [vmem:[%s407 + $0x38] sm:$0xff] %v825
        %1539 = vst [vmem:[%s407 + $0x40] sm:$0xff] %v830
        %1540 = vst [vmem:[%s407 + $0x48] sm:$0xff] %v835
        %1541 = vst [vmem:[%s407 + $0x50] sm:$0xff] %v840
        %1542 = vst [vmem:[%s407 + $0x58] sm:$0xff] %v845
        %1543 = vst [vmem:[%s407 + $0x60] sm:$0xff] %v850
        %1544 = vst [vmem:[%s407 + $0x68] sm:$0xff] %v855
        %1545 = vst [vmem:[%s407 + $0x70] sm:$0xff] %v860
        %1546 = vst [vmem:[%s407 + $0x78] sm:$0xff] %v865
        %s1547 = sand.u32 %s257, 1
        %s1548 = scalar_lea.sflag [#allocation3], %s1547
        %s1549 = sand.u32 %s257, 1
        %s1550 = smul.addr %s1549, 128
        %s1551 = scalar_lea.vmem [#allocation2], %s1550
        %s1552 = sand.u32 %s283, 1
        %s1553 = scalar_lea.sflag [#allocation5], %s1552
        %s1554 = sand.u32 %s283, 1
        %s1555 = smul.addr %s1554, 128
        %s1556 = scalar_lea.vmem [#allocation4], %s1555
        // Predicated region
        $region61: #{tpu_custom_call.1} parent=59 // pred_check
          %p1557 = pneg %p267
        $region62: #{tpu_custom_call.1} parent=59 // pred_check_branch
          %1559 = sbr.rel (%p1557) target = $region64
        $region63: #{tpu_custom_call.1} parent=59 // pred_region
          %s1560 = smul.u32 16, %s29
          %s1562 = ssub.s32 2048, 2048
          %1563 = vsyncadd %s1548, %s1562
          %s1564 = smul.addr %s1560, 128
          %s1565 = scalar_lea.hbm %s10, %s1564
          %s1566 = sshll.u32 %s1551, 4
          %s1567 = int_to_ptr.vmem [resolvable:$true] %s1566
          %1572 = dma.vmem_to_hbm [thread:$0]  %s1567, 2048, %s1565, %s1548, 128, 128, 8
        $region64: #{tpu_custom_call.1} parent=59 // pred_fallthru
          _
        // Predicated region
        $region65: #{tpu_custom_call.1} parent=59 // pred_check
          %p1573 = pneg %p293
        $region66: #{tpu_custom_call.1} parent=59 // pred_check_branch
          %1575 = sbr.rel (%p1573) target = $region68
        $region67: #{tpu_custom_call.1} parent=59 // pred_region
          %s1576 = smul.u32 16, %s29
          %s1578 = ssub.s32 2048, 2048
          %1579 = vsyncadd %s1553, %s1578
          %s1580 = smul.addr %s1576, 128
          %s1581 = scalar_lea.hbm %s11, %s1580
          %s1582 = sshll.u32 %s1556, 4
          %s1583 = int_to_ptr.vmem [resolvable:$true] %s1582
          %1588 = dma.vmem_to_hbm [thread:$0]  %s1583, 2048, %s1581, %s1553, 128, 128, 8
        $region68: #{tpu_custom_call.1} parent=59 // pred_fallthru
          _
      $region60: #{tpu_custom_call.1} parent=5 // pred_fallthru
        _
      %p1589 = scmp.le.s32.totalorder 2, %s24
      // Predicated region
      $region69: #{tpu_custom_call.1} parent=5 // pred_check
        %p1590 = pneg %p1589
      $region70: #{tpu_custom_call.1} parent=5 // pred_check_branch
        %1592 = sbr.rel (%p1590) target = $region72
      $region71: #{tpu_custom_call.1} parent=5 // pred_region
        %s1593 = ssub.s32 %s24, 2
        // Predicated region
        $region73: #{tpu_custom_call.1} parent=71 // pred_check
          %p1594 = pneg %p273
        $region74: #{tpu_custom_call.1} parent=71 // pred_check_branch
          %1596 = sbr.rel (%p1594) target = $region76
        $region75: #{tpu_custom_call.1} parent=71 // pred_region
          %s1597 = sand.u32 %s258, 1
          %s1598 = scalar_lea.sflag [#allocation3], %s1597
          %s1599 = sand.u32 %s258, 1
          %s1600 = smul.addr %s1599, 128
          %s1601 = scalar_lea.vmem [#allocation2], %s1600
          %1602 = dma.done %s1598, 2048
        $region76: #{tpu_custom_call.1} parent=71 // pred_fallthru
          _
        // Predicated region
        $region77: #{tpu_custom_call.1} parent=71 // pred_check
          %p1603 = pneg %p299
        $region78: #{tpu_custom_call.1} parent=71 // pred_check_branch
          %1605 = sbr.rel (%p1603) target = $region80
        $region79: #{tpu_custom_call.1} parent=71 // pred_region
          %s1606 = sand.u32 %s284, 1
          %s1607 = scalar_lea.sflag [#allocation5], %s1606
          %s1608 = sand.u32 %s284, 1
          %s1609 = smul.addr %s1608, 128
          %s1610 = scalar_lea.vmem [#allocation4], %s1609
          %1611 = dma.done %s1607, 2048
        $region80: #{tpu_custom_call.1} parent=71 // pred_fallthru
          _
      $region72: #{tpu_custom_call.1} parent=5 // pred_fallthru
        _
    $region6: #{tpu_custom_call.1} parent=1 // loop_footer
      %s28 = sadd.s32 1, %s24
    $region7: #{tpu_custom_call.1} parent=1 // loop_footer_branch
      %23 = sbr.rel target = $region3
    $region8: #{tpu_custom_call.1} parent=1 // loop_exit
      _
    %1612 = vsyncpa [#allocation3], 1
    %s1613 = scalar_lea.sflag [#allocation3], 1
    %1614 = vsyncpa %s1613, 1
    %1615 = vsyncpa [#allocation5], 1
    %s1616 = scalar_lea.sflag [#allocation5], 1
    %1617 = vsyncpa %s1616, 1

</llo_original>
